<compile_context>
chip_gen: v7x
topology: tpu7x:2x2x1
jax: 0.10.0
libtpu: 0.0.40
codegen_flags: <defaults>
</compile_context>

<pallas_src>
import math
import functools
import numpy as np

import jax
import jax.numpy as jnp
from jax.experimental import pallas as pl
from jax.experimental.pallas import tpu as pltpu


# ---------------------------------------------------------------------------
# Network configuration (net_params) — static constants baked into the kernel.
# ---------------------------------------------------------------------------
NET_PARAMS = {
    'input_channels': 1,
    't_s': 1.0,
    't_end': 16.0,
    't_valid': 30,                     # <= T-1 (p == T-1 is ill-defined in the reference)
    'sr_params':  {'mult': 1.0,  'tau': 2.0, 'epsilon': 0.01},
    'ref_params': {'mult': -2.0, 'tau': 2.0, 'epsilon': 0.01},
    'af_params':  {'theta': 1.0, 'sigma': [0.1, 0.1]},
    'pdf_params': {'scale': 1.0, 'tau': 1.0},   # only used in backward (not implemented)
}

N_IN, N_HID, N_OUT = 250, 25, 1        # SpikeLinear(250, 25), SpikeLinear(25, 1)
T = 32                                 # time steps in the input spike train


# ---------------------------------------------------------------------------
# Parameter setup (plain numpy glue) — faithful to SlayerTrainer kernel math.
# ---------------------------------------------------------------------------
def _calculate_eps_func(mult, tau, epsilon, t_end, t_s):
    eps_func = []
    for t in np.arange(0, t_end, t_s):
        srm_val = mult * t / tau * math.exp(1 - t / tau)
        if abs(srm_val) < abs(epsilon) and t > tau:
            break
        eps_func.append(srm_val)
    return eps_func


def _calculate_srm_kernel_1d(mult, tau, epsilon, t_end, t_s):
    srm_kernel = _calculate_eps_func(mult, tau, epsilon, t_end, t_s)
    if len(srm_kernel) % 2 == 0:
        srm_kernel.append(0)
    srm_kernel = np.asarray(srm_kernel, dtype=np.float32)
    prepended_zeros = np.zeros((len(srm_kernel) - 1,), dtype=np.float32)
    return np.flip(np.concatenate((prepended_zeros, srm_kernel))).copy()


def build_srm_toeplitz(srm_1d, t_len):
    """M[t_in, t_out] such that (x @ M)[h, t_out] == conv3d(x, srm, pad=k//2)."""
    kl = srm_1d.shape[0]
    pad = kl // 2
    M = np.zeros((t_len, t_len), dtype=np.float32)
    for t_out in range(t_len):
        for t_in in range(t_len):
            k = t_in - t_out + pad
            if 0 <= k < kl:
                M[t_in, t_out] = srm_1d[k]
    return M


def build_ref_matrix(ref_vals, t_len):
    """R[p, t] = refractory response added at time t when a spike fires at p.

    Reproduces the reference slice arithmetic exactly:
      resp_length = min(T - p - 1, len(ref))
      potentials[..., p+1 : p+resp_length] += ref[0 : resp_length-1]
    (ref[-1] always dropped, column t == T-1 never touched).
    """
    rl = len(ref_vals)
    R = np.zeros((t_len, t_len), dtype=np.float32)
    for p in range(t_len):
        for t in range(t_len - 1):             # original never touches t == T-1
            j = t - p - 1
            if 0 <= j <= rl - 2:               # original always drops ref[-1]
                R[p, t] = ref_vals[j]
    return R


# ---------------------------------------------------------------------------
# Pallas kernel: whole forward pass, one call, no grid (tiny problem).
# ---------------------------------------------------------------------------
def slayer_kernel(x_ref, w1_ref, w2t_ref, mt_ref, r1_ref, r2_ref, o_ref,
                  *, theta, inv_t_s, t_valid):
    # x_ref  : (N_IN, T)        input spike train, native NCDHW slab (neurons, time)
    # w1_ref : (N_HID, N_IN)    W1 (native conv weight layout)
    # w2t_ref: (N_HID, N_OUT)   W2^T (order-preserving reshape, free)
    # mt_ref : (T, T)           mt[t_out, t_in] = M[t_in, t_out] * t_s  (SRM Toeplitz^T)
    # r1_ref : (T, T, N_HID)    lane-pre-broadcast refractory table for layer 1
    # r2_ref : (T, T, 1)        refractory columns for layer 2 (single neuron)
    # o_ref  : (T, N_OUT)       output spikes (layer 2), time-major
    mt = mt_ref[...]                                      # load once, reused by both layers
    t_len = mt.shape[0]

    # rows >= t_valid never spike in the reference
    valid = jax.lax.broadcasted_iota(jnp.int32, (t_len, 1), 0) < t_valid

    def finalize_spikes(pot):
        # The refractory update at step p only touches times t >= p+1, so the
        # final potential at row p equals the potential seen when row p was
        # thresholded -> spikes can be extracted post-hoc in one shot.
        spk = jnp.where(valid, (pot > theta).astype(jnp.float32), 0.0)
        return spk if inv_t_s == 1.0 else spk * inv_t_s

    # ---- Layer 1: pot1[t, h] = sum_{t_in} mt[t, t_in] * (W1 @ x)[h, t_in]
    # (W1-over-neurons and SRM-over-time commute; keeps all dots standard matmuls
    #  with only a tiny (N_HID, T) in-kernel transpose.)
    h1t = jnp.dot(w1_ref[...], x_ref[...],
                  preferred_element_type=jnp.float32)                 # (N_HID, T)
    pot1 = jnp.dot(mt, h1t.T, preferred_element_type=jnp.float32)     # (T, N_HID)

    # Sequential threshold + refractory feedback, fully unrolled (static slices).
    # Per step: one sublane-row read, one compare, one pure-VALU FMA.  No spike
    # writes and no VMEM round-trips inside the serial chain.
    for p in range(t_valid):
        fired = (pot1[p:p + 1, :] > theta).astype(jnp.float32)        # (1, H)
        pot1 = pot1 + fired * r1_ref[p]                               # (1,H)*(T,H) sublane bcast
    spk1 = finalize_spikes(pot1)                                      # (T, N_HID)

    # ---- Layer 2 (reassociated): pot2 = mt @ (spk1 @ W2^T)  — (T,1) intermediate.
    v_col = jnp.dot(spk1, w2t_ref[...],
                    preferred_element_type=jnp.float32)               # (T, N_OUT)
    pot2 = jnp.dot(mt, v_col, preferred_element_type=jnp.float32)     # (T, N_OUT)

    # Single-neuron spike loop: same post-hoc extraction, so each of the 30
    # serial steps is just {row slice, compare, FMA} — no 1-element masked
    # stores.  Kept time-on-sublanes (proven slice/broadcast patterns).
    for p in range(t_valid):
        fired = (pot2[p:p + 1, :] > theta).astype(jnp.float32)        # (1, N_OUT)
        pot2 = pot2 + fired * r2_ref[p]                               # (1,1)*(T,1)
    o_ref[...] = finalize_spikes(pot2)                                # one full store


@jax.jit
def slayer_forward(x5d, w1, w2, mt_s, r1, r2):
    """x5d: (1, 1, 1, N_IN, T) float32 spike train (NCDHW, like the torch conv3d input)."""
    t_len = x5d.shape[-1]
    x_nt = x5d.reshape(N_IN, t_len)            # free reshape — native (neurons, time) slab
    w2t = w2.reshape(N_HID, N_OUT)             # (1,25)->(25,1): order-preserving (free)

    kern = functools.partial(
        slayer_kernel,
        theta=float(NET_PARAMS['af_params']['theta']),
        inv_t_s=1.0 / float(NET_PARAMS['t_s']),
        t_valid=int(NET_PARAMS['t_valid']),
    )

    out_col = pl.pallas_call(
        kern,
        out_shape=jax.ShapeDtypeStruct((t_len, N_OUT), jnp.float32),
        in_specs=[pl.BlockSpec(memory_space=pltpu.MemorySpace.VMEM) for _ in range(6)],
        out_specs=pl.BlockSpec(memory_space=pltpu.MemorySpace.VMEM),
    )(x_nt, w1, w2t, mt_s, r1, r2)

    # (T, N_OUT) time-major -> (1, 1, 1, N_OUT, T) NCDHW output (N_OUT == 1, so the
    # linear element order is identical and this reshape is free).
    return out_col.reshape(1, 1, 1, N_OUT, t_len)


if __name__ == "__main__":
    # --- build SRM / refractory kernels exactly like SlayerTrainer ---
    sr = NET_PARAMS['sr_params']
    rf = NET_PARAMS['ref_params']
    srm_1d = _calculate_srm_kernel_1d(sr['mult'], sr['tau'], sr['epsilon'],
                                      NET_PARAMS['t_end'], NET_PARAMS['t_s'])
    ref_vals = _calculate_eps_func(rf['mult'], rf['tau'], rf['epsilon'],
                                   NET_PARAMS['t_end'], NET_PARAMS['t_s'])

    # t_s folded into the (transposed) Toeplitz; refractory table lane-pre-broadcast
    # for layer 1 and kept as columns for the single-neuron layer 2.
    M = build_srm_toeplitz(srm_1d, T)
    Mt_s = jnp.asarray(np.ascontiguousarray((M * NET_PARAMS['t_s']).T))           # (T, T)
    R = build_ref_matrix(ref_vals, T)                                             # (T, T)
    R1 = jnp.asarray(np.ascontiguousarray(
        np.broadcast_to(R[:, :, None], (T, T, N_HID))))                           # (T, T, N_HID)
    R2 = jnp.asarray(R[:, :, None])                                               # (T, T, 1)

    # --- deterministic parameters / inputs ---
    key = jax.random.PRNGKey(0)
    kx, k1, k2 = jax.random.split(key, 3)
    # input spike train, NCDHW = (1, 1, 1, 250, T)
    x = (jax.random.uniform(kx, (1, 1, 1, N_IN, T)) < 0.2).astype(jnp.float32)
    # SpikeLinear weights: nn.init.normal_(std=4) on Conv3d weight (out, 1, 1, in, 1)
    W1 = jax.random.normal(k1, (N_HID, N_IN), dtype=jnp.float32) * 4.0
    W2 = jax.random.normal(k2, (N_OUT, N_HID), dtype=jnp.float32) * 4.0

    out = slayer_forward(x, W1, W2, Mt_s, R1, R2)
    out = jax.block_until_ready(out)

    assert out.shape == (1, 1, 1, N_OUT, T)
    # spikes are either 0 or 1/t_s, and only within the first t_valid steps
    inv_ts = 1.0 / NET_PARAMS['t_s']
    assert bool(jnp.all((out == 0.0) | (out == inv_ts)))
    assert bool(jnp.all(out[..., NET_PARAMS['t_valid']:] == 0.0))
    print("KERNEL_OK")
</pallas_src>

<mosaic_0001>
module attributes {stable_mosaic.version = 11 : i64} {
  func.func @slayer_kernel(%arg0: memref<250x32xf32, #tpu.memory_space<vmem>>, %arg1: memref<25x250xf32, #tpu.memory_space<vmem>>, %arg2: memref<25x1xf32, #tpu.memory_space<vmem>>, %arg3: memref<32x32xf32, #tpu.memory_space<vmem>>, %arg4: memref<32x32x25xf32, #tpu.memory_space<vmem>>, %arg5: memref<32x32x1xf32, #tpu.memory_space<vmem>>, %arg6: memref<32x1xf32, #tpu.memory_space<vmem>>) attributes {dimension_semantics = [], scalar_prefetch = 0 : i64, scratch_operands = 0 : i64, tpu.core_type = #tpu.core_type<tc>} {
    %c0 = arith.constant 0 : index
    %c0_0 = arith.constant 0 : index
    %0 = vector.load %arg3[%c0, %c0_0] : memref<32x32xf32, #tpu.memory_space<vmem>>, vector<32x32xf32>
    %1 = tpu.iota {dimensions = array<i32: 0>} : vector<32x1xi32>
    %c30_i32 = arith.constant 30 : i32
    %2 = vector.broadcast %c30_i32 : i32 to vector<32x1xi32>
    %3 = arith.cmpi slt, %1, %2 : vector<32x1xi32>
    %c0_1 = arith.constant 0 : index
    %c0_2 = arith.constant 0 : index
    %4 = vector.load %arg1[%c0_1, %c0_2] : memref<25x250xf32, #tpu.memory_space<vmem>>, vector<25x250xf32>
    %c0_3 = arith.constant 0 : index
    %c0_4 = arith.constant 0 : index
    %5 = vector.load %arg0[%c0_3, %c0_4] : memref<250x32xf32, #tpu.memory_space<vmem>>, vector<250x32xf32>
    %cst = arith.constant dense<0.000000e+00> : vector<25x32xf32>
    %6 = tpu.matmul %4, %5, %cst {dimension_numbers = #tpu.dot_dimension_numbers<[1], [0], [0], [1], [0, 0, 1, 1], [], []>} : vector<25x250xf32>, vector<250x32xf32>, vector<25x32xf32> -> vector<25x32xf32>
    %7 = tpu.transpose %6, [1, 0] : vector<25x32xf32> -> vector<32x25xf32>
    %cst_5 = arith.constant dense<0.000000e+00> : vector<32x25xf32>
    %8 = tpu.matmul %0, %7, %cst_5 {dimension_numbers = #tpu.dot_dimension_numbers<[1], [0], [0], [1], [0, 0, 1, 1], [], []>} : vector<32x32xf32>, vector<32x25xf32>, vector<32x25xf32> -> vector<32x25xf32>
    %9 = vector.extract_strided_slice %8 {offsets = [0, 0], sizes = [1, 25], strides = [1, 1]} : vector<32x25xf32> to vector<1x25xf32>
    %cst_6 = arith.constant 1.000000e+00 : f32
    %10 = vector.broadcast %cst_6 : f32 to vector<1x25xf32>
    %11 = arith.cmpf ogt, %9, %10 : vector<1x25xf32>
    %12 = arith.extui %11 : vector<1x25xi1> to vector<1x25xi32>
    %13 = arith.sitofp %12 : vector<1x25xi32> to vector<1x25xf32>
    %c0_7 = arith.constant 0 : index
    %c0_8 = arith.constant 0 : index
    %c0_9 = arith.constant 0 : index
    %14 = vector.load %arg4[%c0_7, %c0_8, %c0_9] : memref<32x32x25xf32, #tpu.memory_space<vmem>>, vector<1x32x25xf32>
    %15 = vector.shape_cast %14 : vector<1x32x25xf32> to vector<32x25xf32>
    %16 = vector.broadcast %13 : vector<1x25xf32> to vector<32x25xf32>
    %17 = arith.mulf %16, %15 : vector<32x25xf32>
    %18 = arith.addf %8, %17 : vector<32x25xf32>
    %19 = vector.extract_strided_slice %18 {offsets = [1, 0], sizes = [1, 25], strides = [1, 1]} : vector<32x25xf32> to vector<1x25xf32>
    %cst_10 = arith.constant 1.000000e+00 : f32
    %20 = vector.broadcast %cst_10 : f32 to vector<1x25xf32>
    %21 = arith.cmpf ogt, %19, %20 : vector<1x25xf32>
    %22 = arith.extui %21 : vector<1x25xi1> to vector<1x25xi32>
    %23 = arith.sitofp %22 : vector<1x25xi32> to vector<1x25xf32>
    %c1 = arith.constant 1 : index
    %c0_11 = arith.constant 0 : index
    %c0_12 = arith.constant 0 : index
    %24 = vector.load %arg4[%c1, %c0_11, %c0_12] : memref<32x32x25xf32, #tpu.memory_space<vmem>>, vector<1x32x25xf32>
    %25 = vector.shape_cast %24 : vector<1x32x25xf32> to vector<32x25xf32>
    %26 = vector.broadcast %23 : vector<1x25xf32> to vector<32x25xf32>
    %27 = arith.mulf %26, %25 : vector<32x25xf32>
    %28 = arith.addf %18, %27 : vector<32x25xf32>
    %29 = vector.extract_strided_slice %28 {offsets = [2, 0], sizes = [1, 25], strides = [1, 1]} : vector<32x25xf32> to vector<1x25xf32>
    %cst_13 = arith.constant 1.000000e+00 : f32
    %30 = vector.broadcast %cst_13 : f32 to vector<1x25xf32>
    %31 = arith.cmpf ogt, %29, %30 : vector<1x25xf32>
    %32 = arith.extui %31 : vector<1x25xi1> to vector<1x25xi32>
    %33 = arith.sitofp %32 : vector<1x25xi32> to vector<1x25xf32>
    %c2 = arith.constant 2 : index
    %c0_14 = arith.constant 0 : index
    %c0_15 = arith.constant 0 : index
    %34 = vector.load %arg4[%c2, %c0_14, %c0_15] : memref<32x32x25xf32, #tpu.memory_space<vmem>>, vector<1x32x25xf32>
    %35 = vector.shape_cast %34 : vector<1x32x25xf32> to vector<32x25xf32>
    %36 = vector.broadcast %33 : vector<1x25xf32> to vector<32x25xf32>
    %37 = arith.mulf %36, %35 : vector<32x25xf32>
    %38 = arith.addf %28, %37 : vector<32x25xf32>
    %39 = vector.extract_strided_slice %38 {offsets = [3, 0], sizes = [1, 25], strides = [1, 1]} : vector<32x25xf32> to vector<1x25xf32>
    %cst_16 = arith.constant 1.000000e+00 : f32
    %40 = vector.broadcast %cst_16 : f32 to vector<1x25xf32>
    %41 = arith.cmpf ogt, %39, %40 : vector<1x25xf32>
    %42 = arith.extui %41 : vector<1x25xi1> to vector<1x25xi32>
    %43 = arith.sitofp %42 : vector<1x25xi32> to vector<1x25xf32>
    %c3 = arith.constant 3 : index
    %c0_17 = arith.constant 0 : index
    %c0_18 = arith.constant 0 : index
    %44 = vector.load %arg4[%c3, %c0_17, %c0_18] : memref<32x32x25xf32, #tpu.memory_space<vmem>>, vector<1x32x25xf32>
    %45 = vector.shape_cast %44 : vector<1x32x25xf32> to vector<32x25xf32>
    %46 = vector.broadcast %43 : vector<1x25xf32> to vector<32x25xf32>
    %47 = arith.mulf %46, %45 : vector<32x25xf32>
    %48 = arith.addf %38, %47 : vector<32x25xf32>
    %49 = vector.extract_strided_slice %48 {offsets = [4, 0], sizes = [1, 25], strides = [1, 1]} : vector<32x25xf32> to vector<1x25xf32>
    %cst_19 = arith.constant 1.000000e+00 : f32
    %50 = vector.broadcast %cst_19 : f32 to vector<1x25xf32>
    %51 = arith.cmpf ogt, %49, %50 : vector<1x25xf32>
    %52 = arith.extui %51 : vector<1x25xi1> to vector<1x25xi32>
    %53 = arith.sitofp %52 : vector<1x25xi32> to vector<1x25xf32>
    %c4 = arith.constant 4 : index
    %c0_20 = arith.constant 0 : index
    %c0_21 = arith.constant 0 : index
    %54 = vector.load %arg4[%c4, %c0_20, %c0_21] : memref<32x32x25xf32, #tpu.memory_space<vmem>>, vector<1x32x25xf32>
    %55 = vector.shape_cast %54 : vector<1x32x25xf32> to vector<32x25xf32>
    %56 = vector.broadcast %53 : vector<1x25xf32> to vector<32x25xf32>
    %57 = arith.mulf %56, %55 : vector<32x25xf32>
    %58 = arith.addf %48, %57 : vector<32x25xf32>
    %59 = vector.extract_strided_slice %58 {offsets = [5, 0], sizes = [1, 25], strides = [1, 1]} : vector<32x25xf32> to vector<1x25xf32>
    %cst_22 = arith.constant 1.000000e+00 : f32
    %60 = vector.broadcast %cst_22 : f32 to vector<1x25xf32>
    %61 = arith.cmpf ogt, %59, %60 : vector<1x25xf32>
    %62 = arith.extui %61 : vector<1x25xi1> to vector<1x25xi32>
    %63 = arith.sitofp %62 : vector<1x25xi32> to vector<1x25xf32>
    %c5 = arith.constant 5 : index
    %c0_23 = arith.constant 0 : index
    %c0_24 = arith.constant 0 : index
    %64 = vector.load %arg4[%c5, %c0_23, %c0_24] : memref<32x32x25xf32, #tpu.memory_space<vmem>>, vector<1x32x25xf32>
    %65 = vector.shape_cast %64 : vector<1x32x25xf32> to vector<32x25xf32>
    %66 = vector.broadcast %63 : vector<1x25xf32> to vector<32x25xf32>
    %67 = arith.mulf %66, %65 : vector<32x25xf32>
    %68 = arith.addf %58, %67 : vector<32x25xf32>
    %69 = vector.extract_strided_slice %68 {offsets = [6, 0], sizes = [1, 25], strides = [1, 1]} : vector<32x25xf32> to vector<1x25xf32>
    %cst_25 = arith.constant 1.000000e+00 : f32
    %70 = vector.broadcast %cst_25 : f32 to vector<1x25xf32>
    %71 = arith.cmpf ogt, %69, %70 : vector<1x25xf32>
    %72 = arith.extui %71 : vector<1x25xi1> to vector<1x25xi32>
    %73 = arith.sitofp %72 : vector<1x25xi32> to vector<1x25xf32>
    %c6 = arith.constant 6 : index
    %c0_26 = arith.constant 0 : index
    %c0_27 = arith.constant 0 : index
    %74 = vector.load %arg4[%c6, %c0_26, %c0_27] : memref<32x32x25xf32, #tpu.memory_space<vmem>>, vector<1x32x25xf32>
    %75 = vector.shape_cast %74 : vector<1x32x25xf32> to vector<32x25xf32>
    %76 = vector.broadcast %73 : vector<1x25xf32> to vector<32x25xf32>
    %77 = arith.mulf %76, %75 : vector<32x25xf32>
    %78 = arith.addf %68, %77 : vector<32x25xf32>
    %79 = vector.extract_strided_slice %78 {offsets = [7, 0], sizes = [1, 25], strides = [1, 1]} : vector<32x25xf32> to vector<1x25xf32>
    %cst_28 = arith.constant 1.000000e+00 : f32
    %80 = vector.broadcast %cst_28 : f32 to vector<1x25xf32>
    %81 = arith.cmpf ogt, %79, %80 : vector<1x25xf32>
    %82 = arith.extui %81 : vector<1x25xi1> to vector<1x25xi32>
    %83 = arith.sitofp %82 : vector<1x25xi32> to vector<1x25xf32>
    %c7 = arith.constant 7 : index
    %c0_29 = arith.constant 0 : index
    %c0_30 = arith.constant 0 : index
    %84 = vector.load %arg4[%c7, %c0_29, %c0_30] : memref<32x32x25xf32, #tpu.memory_space<vmem>>, vector<1x32x25xf32>
    %85 = vector.shape_cast %84 : vector<1x32x25xf32> to vector<32x25xf32>
    %86 = vector.broadcast %83 : vector<1x25xf32> to vector<32x25xf32>
    %87 = arith.mulf %86, %85 : vector<32x25xf32>
    %88 = arith.addf %78, %87 : vector<32x25xf32>
    %89 = vector.extract_strided_slice %88 {offsets = [8, 0], sizes = [1, 25], strides = [1, 1]} : vector<32x25xf32> to vector<1x25xf32>
    %cst_31 = arith.constant 1.000000e+00 : f32
    %90 = vector.broadcast %cst_31 : f32 to vector<1x25xf32>
    %91 = arith.cmpf ogt, %89, %90 : vector<1x25xf32>
    %92 = arith.extui %91 : vector<1x25xi1> to vector<1x25xi32>
    %93 = arith.sitofp %92 : vector<1x25xi32> to vector<1x25xf32>
    %c8 = arith.constant 8 : index
    %c0_32 = arith.constant 0 : index
    %c0_33 = arith.constant 0 : index
    %94 = vector.load %arg4[%c8, %c0_32, %c0_33] : memref<32x32x25xf32, #tpu.memory_space<vmem>>, vector<1x32x25xf32>
    %95 = vector.shape_cast %94 : vector<1x32x25xf32> to vector<32x25xf32>
    %96 = vector.broadcast %93 : vector<1x25xf32> to vector<32x25xf32>
    %97 = arith.mulf %96, %95 : vector<32x25xf32>
    %98 = arith.addf %88, %97 : vector<32x25xf32>
    %99 = vector.extract_strided_slice %98 {offsets = [9, 0], sizes = [1, 25], strides = [1, 1]} : vector<32x25xf32> to vector<1x25xf32>
    %cst_34 = arith.constant 1.000000e+00 : f32
    %100 = vector.broadcast %cst_34 : f32 to vector<1x25xf32>
    %101 = arith.cmpf ogt, %99, %100 : vector<1x25xf32>
    %102 = arith.extui %101 : vector<1x25xi1> to vector<1x25xi32>
    %103 = arith.sitofp %102 : vector<1x25xi32> to vector<1x25xf32>
    %c9 = arith.constant 9 : index
    %c0_35 = arith.constant 0 : index
    %c0_36 = arith.constant 0 : index
    %104 = vector.load %arg4[%c9, %c0_35, %c0_36] : memref<32x32x25xf32, #tpu.memory_space<vmem>>, vector<1x32x25xf32>
    %105 = vector.shape_cast %104 : vector<1x32x25xf32> to vector<32x25xf32>
    %106 = vector.broadcast %103 : vector<1x25xf32> to vector<32x25xf32>
    %107 = arith.mulf %106, %105 : vector<32x25xf32>
    %108 = arith.addf %98, %107 : vector<32x25xf32>
    %109 = vector.extract_strided_slice %108 {offsets = [10, 0], sizes = [1, 25], strides = [1, 1]} : vector<32x25xf32> to vector<1x25xf32>
    %cst_37 = arith.constant 1.000000e+00 : f32
    %110 = vector.broadcast %cst_37 : f32 to vector<1x25xf32>
    %111 = arith.cmpf ogt, %109, %110 : vector<1x25xf32>
    %112 = arith.extui %111 : vector<1x25xi1> to vector<1x25xi32>
    %113 = arith.sitofp %112 : vector<1x25xi32> to vector<1x25xf32>
    %c10 = arith.constant 10 : index
    %c0_38 = arith.constant 0 : index
    %c0_39 = arith.constant 0 : index
    %114 = vector.load %arg4[%c10, %c0_38, %c0_39] : memref<32x32x25xf32, #tpu.memory_space<vmem>>, vector<1x32x25xf32>
    %115 = vector.shape_cast %114 : vector<1x32x25xf32> to vector<32x25xf32>
    %116 = vector.broadcast %113 : vector<1x25xf32> to vector<32x25xf32>
    %117 = arith.mulf %116, %115 : vector<32x25xf32>
    %118 = arith.addf %108, %117 : vector<32x25xf32>
    %119 = vector.extract_strided_slice %118 {offsets = [11, 0], sizes = [1, 25], strides = [1, 1]} : vector<32x25xf32> to vector<1x25xf32>
    %cst_40 = arith.constant 1.000000e+00 : f32
    %120 = vector.broadcast %cst_40 : f32 to vector<1x25xf32>
    %121 = arith.cmpf ogt, %119, %120 : vector<1x25xf32>
    %122 = arith.extui %121 : vector<1x25xi1> to vector<1x25xi32>
    %123 = arith.sitofp %122 : vector<1x25xi32> to vector<1x25xf32>
    %c11 = arith.constant 11 : index
    %c0_41 = arith.constant 0 : index
    %c0_42 = arith.constant 0 : index
    %124 = vector.load %arg4[%c11, %c0_41, %c0_42] : memref<32x32x25xf32, #tpu.memory_space<vmem>>, vector<1x32x25xf32>
    %125 = vector.shape_cast %124 : vector<1x32x25xf32> to vector<32x25xf32>
    %126 = vector.broadcast %123 : vector<1x25xf32> to vector<32x25xf32>
    %127 = arith.mulf %126, %125 : vector<32x25xf32>
    %128 = arith.addf %118, %127 : vector<32x25xf32>
    %129 = vector.extract_strided_slice %128 {offsets = [12, 0], sizes = [1, 25], strides = [1, 1]} : vector<32x25xf32> to vector<1x25xf32>
    %cst_43 = arith.constant 1.000000e+00 : f32
    %130 = vector.broadcast %cst_43 : f32 to vector<1x25xf32>
    %131 = arith.cmpf ogt, %129, %130 : vector<1x25xf32>
    %132 = arith.extui %131 : vector<1x25xi1> to vector<1x25xi32>
    %133 = arith.sitofp %132 : vector<1x25xi32> to vector<1x25xf32>
    %c12 = arith.constant 12 : index
    %c0_44 = arith.constant 0 : index
    %c0_45 = arith.constant 0 : index
    %134 = vector.load %arg4[%c12, %c0_44, %c0_45] : memref<32x32x25xf32, #tpu.memory_space<vmem>>, vector<1x32x25xf32>
    %135 = vector.shape_cast %134 : vector<1x32x25xf32> to vector<32x25xf32>
    %136 = vector.broadcast %133 : vector<1x25xf32> to vector<32x25xf32>
    %137 = arith.mulf %136, %135 : vector<32x25xf32>
    %138 = arith.addf %128, %137 : vector<32x25xf32>
    %139 = vector.extract_strided_slice %138 {offsets = [13, 0], sizes = [1, 25], strides = [1, 1]} : vector<32x25xf32> to vector<1x25xf32>
    %cst_46 = arith.constant 1.000000e+00 : f32
    %140 = vector.broadcast %cst_46 : f32 to vector<1x25xf32>
    %141 = arith.cmpf ogt, %139, %140 : vector<1x25xf32>
    %142 = arith.extui %141 : vector<1x25xi1> to vector<1x25xi32>
    %143 = arith.sitofp %142 : vector<1x25xi32> to vector<1x25xf32>
    %c13 = arith.constant 13 : index
    %c0_47 = arith.constant 0 : index
    %c0_48 = arith.constant 0 : index
    %144 = vector.load %arg4[%c13, %c0_47, %c0_48] : memref<32x32x25xf32, #tpu.memory_space<vmem>>, vector<1x32x25xf32>
    %145 = vector.shape_cast %144 : vector<1x32x25xf32> to vector<32x25xf32>
    %146 = vector.broadcast %143 : vector<1x25xf32> to vector<32x25xf32>
    %147 = arith.mulf %146, %145 : vector<32x25xf32>
    %148 = arith.addf %138, %147 : vector<32x25xf32>
    %149 = vector.extract_strided_slice %148 {offsets = [14, 0], sizes = [1, 25], strides = [1, 1]} : vector<32x25xf32> to vector<1x25xf32>
    %cst_49 = arith.constant 1.000000e+00 : f32
    %150 = vector.broadcast %cst_49 : f32 to vector<1x25xf32>
    %151 = arith.cmpf ogt, %149, %150 : vector<1x25xf32>
    %152 = arith.extui %151 : vector<1x25xi1> to vector<1x25xi32>
    %153 = arith.sitofp %152 : vector<1x25xi32> to vector<1x25xf32>
    %c14 = arith.constant 14 : index
    %c0_50 = arith.constant 0 : index
    %c0_51 = arith.constant 0 : index
    %154 = vector.load %arg4[%c14, %c0_50, %c0_51] : memref<32x32x25xf32, #tpu.memory_space<vmem>>, vector<1x32x25xf32>
    %155 = vector.shape_cast %154 : vector<1x32x25xf32> to vector<32x25xf32>
    %156 = vector.broadcast %153 : vector<1x25xf32> to vector<32x25xf32>
    %157 = arith.mulf %156, %155 : vector<32x25xf32>
    %158 = arith.addf %148, %157 : vector<32x25xf32>
    %159 = vector.extract_strided_slice %158 {offsets = [15, 0], sizes = [1, 25], strides = [1, 1]} : vector<32x25xf32> to vector<1x25xf32>
    %cst_52 = arith.constant 1.000000e+00 : f32
    %160 = vector.broadcast %cst_52 : f32 to vector<1x25xf32>
    %161 = arith.cmpf ogt, %159, %160 : vector<1x25xf32>
    %162 = arith.extui %161 : vector<1x25xi1> to vector<1x25xi32>
    %163 = arith.sitofp %162 : vector<1x25xi32> to vector<1x25xf32>
    %c15 = arith.constant 15 : index
    %c0_53 = arith.constant 0 : index
    %c0_54 = arith.constant 0 : index
    %164 = vector.load %arg4[%c15, %c0_53, %c0_54] : memref<32x32x25xf32, #tpu.memory_space<vmem>>, vector<1x32x25xf32>
    %165 = vector.shape_cast %164 : vector<1x32x25xf32> to vector<32x25xf32>
    %166 = vector.broadcast %163 : vector<1x25xf32> to vector<32x25xf32>
    %167 = arith.mulf %166, %165 : vector<32x25xf32>
    %168 = arith.addf %158, %167 : vector<32x25xf32>
    %169 = vector.extract_strided_slice %168 {offsets = [16, 0], sizes = [1, 25], strides = [1, 1]} : vector<32x25xf32> to vector<1x25xf32>
    %cst_55 = arith.constant 1.000000e+00 : f32
    %170 = vector.broadcast %cst_55 : f32 to vector<1x25xf32>
    %171 = arith.cmpf ogt, %169, %170 : vector<1x25xf32>
    %172 = arith.extui %171 : vector<1x25xi1> to vector<1x25xi32>
    %173 = arith.sitofp %172 : vector<1x25xi32> to vector<1x25xf32>
    %c16 = arith.constant 16 : index
    %c0_56 = arith.constant 0 : index
    %c0_57 = arith.constant 0 : index
    %174 = vector.load %arg4[%c16, %c0_56, %c0_57] : memref<32x32x25xf32, #tpu.memory_space<vmem>>, vector<1x32x25xf32>
    %175 = vector.shape_cast %174 : vector<1x32x25xf32> to vector<32x25xf32>
    %176 = vector.broadcast %173 : vector<1x25xf32> to vector<32x25xf32>
    %177 = arith.mulf %176, %175 : vector<32x25xf32>
    %178 = arith.addf %168, %177 : vector<32x25xf32>
    %179 = vector.extract_strided_slice %178 {offsets = [17, 0], sizes = [1, 25], strides = [1, 1]} : vector<32x25xf32> to vector<1x25xf32>
    %cst_58 = arith.constant 1.000000e+00 : f32
    %180 = vector.broadcast %cst_58 : f32 to vector<1x25xf32>
    %181 = arith.cmpf ogt, %179, %180 : vector<1x25xf32>
    %182 = arith.extui %181 : vector<1x25xi1> to vector<1x25xi32>
    %183 = arith.sitofp %182 : vector<1x25xi32> to vector<1x25xf32>
    %c17 = arith.constant 17 : index
    %c0_59 = arith.constant 0 : index
    %c0_60 = arith.constant 0 : index
    %184 = vector.load %arg4[%c17, %c0_59, %c0_60] : memref<32x32x25xf32, #tpu.memory_space<vmem>>, vector<1x32x25xf32>
    %185 = vector.shape_cast %184 : vector<1x32x25xf32> to vector<32x25xf32>
    %186 = vector.broadcast %183 : vector<1x25xf32> to vector<32x25xf32>
    %187 = arith.mulf %186, %185 : vector<32x25xf32>
    %188 = arith.addf %178, %187 : vector<32x25xf32>
    %189 = vector.extract_strided_slice %188 {offsets = [18, 0], sizes = [1, 25], strides = [1, 1]} : vector<32x25xf32> to vector<1x25xf32>
    %cst_61 = arith.constant 1.000000e+00 : f32
    %190 = vector.broadcast %cst_61 : f32 to vector<1x25xf32>
    %191 = arith.cmpf ogt, %189, %190 : vector<1x25xf32>
    %192 = arith.extui %191 : vector<1x25xi1> to vector<1x25xi32>
    %193 = arith.sitofp %192 : vector<1x25xi32> to vector<1x25xf32>
    %c18 = arith.constant 18 : index
    %c0_62 = arith.constant 0 : index
    %c0_63 = arith.constant 0 : index
    %194 = vector.load %arg4[%c18, %c0_62, %c0_63] : memref<32x32x25xf32, #tpu.memory_space<vmem>>, vector<1x32x25xf32>
    %195 = vector.shape_cast %194 : vector<1x32x25xf32> to vector<32x25xf32>
    %196 = vector.broadcast %193 : vector<1x25xf32> to vector<32x25xf32>
    %197 = arith.mulf %196, %195 : vector<32x25xf32>
    %198 = arith.addf %188, %197 : vector<32x25xf32>
    %199 = vector.extract_strided_slice %198 {offsets = [19, 0], sizes = [1, 25], strides = [1, 1]} : vector<32x25xf32> to vector<1x25xf32>
    %cst_64 = arith.constant 1.000000e+00 : f32
    %200 = vector.broadcast %cst_64 : f32 to vector<1x25xf32>
    %201 = arith.cmpf ogt, %199, %200 : vector<1x25xf32>
    %202 = arith.extui %201 : vector<1x25xi1> to vector<1x25xi32>
    %203 = arith.sitofp %202 : vector<1x25xi32> to vector<1x25xf32>
    %c19 = arith.constant 19 : index
    %c0_65 = arith.constant 0 : index
    %c0_66 = arith.constant 0 : index
    %204 = vector.load %arg4[%c19, %c0_65, %c0_66] : memref<32x32x25xf32, #tpu.memory_space<vmem>>, vector<1x32x25xf32>
    %205 = vector.shape_cast %204 : vector<1x32x25xf32> to vector<32x25xf32>
    %206 = vector.broadcast %203 : vector<1x25xf32> to vector<32x25xf32>
    %207 = arith.mulf %206, %205 : vector<32x25xf32>
    %208 = arith.addf %198, %207 : vector<32x25xf32>
    %209 = vector.extract_strided_slice %208 {offsets = [20, 0], sizes = [1, 25], strides = [1, 1]} : vector<32x25xf32> to vector<1x25xf32>
    %cst_67 = arith.constant 1.000000e+00 : f32
    %210 = vector.broadcast %cst_67 : f32 to vector<1x25xf32>
    %211 = arith.cmpf ogt, %209, %210 : vector<1x25xf32>
    %212 = arith.extui %211 : vector<1x25xi1> to vector<1x25xi32>
    %213 = arith.sitofp %212 : vector<1x25xi32> to vector<1x25xf32>
    %c20 = arith.constant 20 : index
    %c0_68 = arith.constant 0 : index
    %c0_69 = arith.constant 0 : index
    %214 = vector.load %arg4[%c20, %c0_68, %c0_69] : memref<32x32x25xf32, #tpu.memory_space<vmem>>, vector<1x32x25xf32>
    %215 = vector.shape_cast %214 : vector<1x32x25xf32> to vector<32x25xf32>
    %216 = vector.broadcast %213 : vector<1x25xf32> to vector<32x25xf32>
    %217 = arith.mulf %216, %215 : vector<32x25xf32>
    %218 = arith.addf %208, %217 : vector<32x25xf32>
    %219 = vector.extract_strided_slice %218 {offsets = [21, 0], sizes = [1, 25], strides = [1, 1]} : vector<32x25xf32> to vector<1x25xf32>
    %cst_70 = arith.constant 1.000000e+00 : f32
    %220 = vector.broadcast %cst_70 : f32 to vector<1x25xf32>
    %221 = arith.cmpf ogt, %219, %220 : vector<1x25xf32>
    %222 = arith.extui %221 : vector<1x25xi1> to vector<1x25xi32>
    %223 = arith.sitofp %222 : vector<1x25xi32> to vector<1x25xf32>
    %c21 = arith.constant 21 : index
    %c0_71 = arith.constant 0 : index
    %c0_72 = arith.constant 0 : index
    %224 = vector.load %arg4[%c21, %c0_71, %c0_72] : memref<32x32x25xf32, #tpu.memory_space<vmem>>, vector<1x32x25xf32>
    %225 = vector.shape_cast %224 : vector<1x32x25xf32> to vector<32x25xf32>
    %226 = vector.broadcast %223 : vector<1x25xf32> to vector<32x25xf32>
    %227 = arith.mulf %226, %225 : vector<32x25xf32>
    %228 = arith.addf %218, %227 : vector<32x25xf32>
    %229 = vector.extract_strided_slice %228 {offsets = [22, 0], sizes = [1, 25], strides = [1, 1]} : vector<32x25xf32> to vector<1x25xf32>
    %cst_73 = arith.constant 1.000000e+00 : f32
    %230 = vector.broadcast %cst_73 : f32 to vector<1x25xf32>
    %231 = arith.cmpf ogt, %229, %230 : vector<1x25xf32>
    %232 = arith.extui %231 : vector<1x25xi1> to vector<1x25xi32>
    %233 = arith.sitofp %232 : vector<1x25xi32> to vector<1x25xf32>
    %c22 = arith.constant 22 : index
    %c0_74 = arith.constant 0 : index
    %c0_75 = arith.constant 0 : index
    %234 = vector.load %arg4[%c22, %c0_74, %c0_75] : memref<32x32x25xf32, #tpu.memory_space<vmem>>, vector<1x32x25xf32>
    %235 = vector.shape_cast %234 : vector<1x32x25xf32> to vector<32x25xf32>
    %236 = vector.broadcast %233 : vector<1x25xf32> to vector<32x25xf32>
    %237 = arith.mulf %236, %235 : vector<32x25xf32>
    %238 = arith.addf %228, %237 : vector<32x25xf32>
    %239 = vector.extract_strided_slice %238 {offsets = [23, 0], sizes = [1, 25], strides = [1, 1]} : vector<32x25xf32> to vector<1x25xf32>
    %cst_76 = arith.constant 1.000000e+00 : f32
    %240 = vector.broadcast %cst_76 : f32 to vector<1x25xf32>
    %241 = arith.cmpf ogt, %239, %240 : vector<1x25xf32>
    %242 = arith.extui %241 : vector<1x25xi1> to vector<1x25xi32>
    %243 = arith.sitofp %242 : vector<1x25xi32> to vector<1x25xf32>
    %c23 = arith.constant 23 : index
    %c0_77 = arith.constant 0 : index
    %c0_78 = arith.constant 0 : index
    %244 = vector.load %arg4[%c23, %c0_77, %c0_78] : memref<32x32x25xf32, #tpu.memory_space<vmem>>, vector<1x32x25xf32>
    %245 = vector.shape_cast %244 : vector<1x32x25xf32> to vector<32x25xf32>
    %246 = vector.broadcast %243 : vector<1x25xf32> to vector<32x25xf32>
    %247 = arith.mulf %246, %245 : vector<32x25xf32>
    %248 = arith.addf %238, %247 : vector<32x25xf32>
    %249 = vector.extract_strided_slice %248 {offsets = [24, 0], sizes = [1, 25], strides = [1, 1]} : vector<32x25xf32> to vector<1x25xf32>
    %cst_79 = arith.constant 1.000000e+00 : f32
    %250 = vector.broadcast %cst_79 : f32 to vector<1x25xf32>
    %251 = arith.cmpf ogt, %249, %250 : vector<1x25xf32>
    %252 = arith.extui %251 : vector<1x25xi1> to vector<1x25xi32>
    %253 = arith.sitofp %252 : vector<1x25xi32> to vector<1x25xf32>
    %c24 = arith.constant 24 : index
    %c0_80 = arith.constant 0 : index
    %c0_81 = arith.constant 0 : index
    %254 = vector.load %arg4[%c24, %c0_80, %c0_81] : memref<32x32x25xf32, #tpu.memory_space<vmem>>, vector<1x32x25xf32>
    %255 = vector.shape_cast %254 : vector<1x32x25xf32> to vector<32x25xf32>
    %256 = vector.broadcast %253 : vector<1x25xf32> to vector<32x25xf32>
    %257 = arith.mulf %256, %255 : vector<32x25xf32>
    %258 = arith.addf %248, %257 : vector<32x25xf32>
    %259 = vector.extract_strided_slice %258 {offsets = [25, 0], sizes = [1, 25], strides = [1, 1]} : vector<32x25xf32> to vector<1x25xf32>
    %cst_82 = arith.constant 1.000000e+00 : f32
    %260 = vector.broadcast %cst_82 : f32 to vector<1x25xf32>
    %261 = arith.cmpf ogt, %259, %260 : vector<1x25xf32>
    %262 = arith.extui %261 : vector<1x25xi1> to vector<1x25xi32>
    %263 = arith.sitofp %262 : vector<1x25xi32> to vector<1x25xf32>
    %c25 = arith.constant 25 : index
    %c0_83 = arith.constant 0 : index
    %c0_84 = arith.constant 0 : index
    %264 = vector.load %arg4[%c25, %c0_83, %c0_84] : memref<32x32x25xf32, #tpu.memory_space<vmem>>, vector<1x32x25xf32>
    %265 = vector.shape_cast %264 : vector<1x32x25xf32> to vector<32x25xf32>
    %266 = vector.broadcast %263 : vector<1x25xf32> to vector<32x25xf32>
    %267 = arith.mulf %266, %265 : vector<32x25xf32>
    %268 = arith.addf %258, %267 : vector<32x25xf32>
    %269 = vector.extract_strided_slice %268 {offsets = [26, 0], sizes = [1, 25], strides = [1, 1]} : vector<32x25xf32> to vector<1x25xf32>
    %cst_85 = arith.constant 1.000000e+00 : f32
    %270 = vector.broadcast %cst_85 : f32 to vector<1x25xf32>
    %271 = arith.cmpf ogt, %269, %270 : vector<1x25xf32>
    %272 = arith.extui %271 : vector<1x25xi1> to vector<1x25xi32>
    %273 = arith.sitofp %272 : vector<1x25xi32> to vector<1x25xf32>
    %c26 = arith.constant 26 : index
    %c0_86 = arith.constant 0 : index
    %c0_87 = arith.constant 0 : index
    %274 = vector.load %arg4[%c26, %c0_86, %c0_87] : memref<32x32x25xf32, #tpu.memory_space<vmem>>, vector<1x32x25xf32>
    %275 = vector.shape_cast %274 : vector<1x32x25xf32> to vector<32x25xf32>
    %276 = vector.broadcast %273 : vector<1x25xf32> to vector<32x25xf32>
    %277 = arith.mulf %276, %275 : vector<32x25xf32>
    %278 = arith.addf %268, %277 : vector<32x25xf32>
    %279 = vector.extract_strided_slice %278 {offsets = [27, 0], sizes = [1, 25], strides = [1, 1]} : vector<32x25xf32> to vector<1x25xf32>
    %cst_88 = arith.constant 1.000000e+00 : f32
    %280 = vector.broadcast %cst_88 : f32 to vector<1x25xf32>
    %281 = arith.cmpf ogt, %279, %280 : vector<1x25xf32>
    %282 = arith.extui %281 : vector<1x25xi1> to vector<1x25xi32>
    %283 = arith.sitofp %282 : vector<1x25xi32> to vector<1x25xf32>
    %c27 = arith.constant 27 : index
    %c0_89 = arith.constant 0 : index
    %c0_90 = arith.constant 0 : index
    %284 = vector.load %arg4[%c27, %c0_89, %c0_90] : memref<32x32x25xf32, #tpu.memory_space<vmem>>, vector<1x32x25xf32>
    %285 = vector.shape_cast %284 : vector<1x32x25xf32> to vector<32x25xf32>
    %286 = vector.broadcast %283 : vector<1x25xf32> to vector<32x25xf32>
    %287 = arith.mulf %286, %285 : vector<32x25xf32>
    %288 = arith.addf %278, %287 : vector<32x25xf32>
    %289 = vector.extract_strided_slice %288 {offsets = [28, 0], sizes = [1, 25], strides = [1, 1]} : vector<32x25xf32> to vector<1x25xf32>
    %cst_91 = arith.constant 1.000000e+00 : f32
    %290 = vector.broadcast %cst_91 : f32 to vector<1x25xf32>
    %291 = arith.cmpf ogt, %289, %290 : vector<1x25xf32>
    %292 = arith.extui %291 : vector<1x25xi1> to vector<1x25xi32>
    %293 = arith.sitofp %292 : vector<1x25xi32> to vector<1x25xf32>
    %c28 = arith.constant 28 : index
    %c0_92 = arith.constant 0 : index
    %c0_93 = arith.constant 0 : index
    %294 = vector.load %arg4[%c28, %c0_92, %c0_93] : memref<32x32x25xf32, #tpu.memory_space<vmem>>, vector<1x32x25xf32>
    %295 = vector.shape_cast %294 : vector<1x32x25xf32> to vector<32x25xf32>
    %296 = vector.broadcast %293 : vector<1x25xf32> to vector<32x25xf32>
    %297 = arith.mulf %296, %295 : vector<32x25xf32>
    %298 = arith.addf %288, %297 : vector<32x25xf32>
    %299 = vector.extract_strided_slice %298 {offsets = [29, 0], sizes = [1, 25], strides = [1, 1]} : vector<32x25xf32> to vector<1x25xf32>
    %cst_94 = arith.constant 1.000000e+00 : f32
    %300 = vector.broadcast %cst_94 : f32 to vector<1x25xf32>
    %301 = arith.cmpf ogt, %299, %300 : vector<1x25xf32>
    %302 = arith.extui %301 : vector<1x25xi1> to vector<1x25xi32>
    %303 = arith.sitofp %302 : vector<1x25xi32> to vector<1x25xf32>
    %c29 = arith.constant 29 : index
    %c0_95 = arith.constant 0 : index
    %c0_96 = arith.constant 0 : index
    %304 = vector.load %arg4[%c29, %c0_95, %c0_96] : memref<32x32x25xf32, #tpu.memory_space<vmem>>, vector<1x32x25xf32>
    %305 = vector.shape_cast %304 : vector<1x32x25xf32> to vector<32x25xf32>
    %306 = vector.broadcast %303 : vector<1x25xf32> to vector<32x25xf32>
    %307 = arith.mulf %306, %305 : vector<32x25xf32>
    %308 = arith.addf %298, %307 : vector<32x25xf32>
    %cst_97 = arith.constant 1.000000e+00 : f32
    %309 = vector.broadcast %cst_97 : f32 to vector<32x25xf32>
    %310 = arith.cmpf ogt, %308, %309 : vector<32x25xf32>
    %311 = arith.extui %310 : vector<32x25xi1> to vector<32x25xi32>
    %312 = arith.sitofp %311 : vector<32x25xi32> to vector<32x25xf32>
    %cst_98 = arith.constant 0.000000e+00 : f32
    %313 = vector.shape_cast %3 : vector<32x1xi1> to vector<32x1xi1>
    %314 = vector.broadcast %313 : vector<32x1xi1> to vector<32x25xi1>
    %315 = vector.broadcast %cst_98 : f32 to vector<32x25xf32>
    %316 = arith.select %314, %312, %315 : vector<32x25xi1>, vector<32x25xf32>
    %c0_99 = arith.constant 0 : index
    %c0_100 = arith.constant 0 : index
    %317 = vector.load %arg2[%c0_99, %c0_100] : memref<25x1xf32, #tpu.memory_space<vmem>>, vector<25x1xf32>
    %cst_101 = arith.constant dense<0.000000e+00> : vector<32x1xf32>
    %318 = tpu.matmul %316, %317, %cst_101 {dimension_numbers = #tpu.dot_dimension_numbers<[1], [0], [0], [1], [0, 0, 1, 1], [], []>} : vector<32x25xf32>, vector<25x1xf32>, vector<32x1xf32> -> vector<32x1xf32>
    %cst_102 = arith.constant dense<0.000000e+00> : vector<32x1xf32>
    %319 = tpu.matmul %0, %318, %cst_102 {dimension_numbers = #tpu.dot_dimension_numbers<[1], [0], [0], [1], [0, 0, 1, 1], [], []>} : vector<32x32xf32>, vector<32x1xf32>, vector<32x1xf32> -> vector<32x1xf32>
    %320 = vector.extract_strided_slice %319 {offsets = [0, 0], sizes = [1, 1], strides = [1, 1]} : vector<32x1xf32> to vector<1x1xf32>
    %cst_103 = arith.constant 1.000000e+00 : f32
    %321 = vector.broadcast %cst_103 : f32 to vector<1x1xf32>
    %322 = arith.cmpf ogt, %320, %321 : vector<1x1xf32>
    %323 = arith.extui %322 : vector<1x1xi1> to vector<1x1xi32>
    %324 = arith.sitofp %323 : vector<1x1xi32> to vector<1x1xf32>
    %c0_104 = arith.constant 0 : index
    %c0_105 = arith.constant 0 : index
    %c0_106 = arith.constant 0 : index
    %325 = vector.load %arg5[%c0_104, %c0_105, %c0_106] : memref<32x32x1xf32, #tpu.memory_space<vmem>>, vector<1x32x1xf32>
    %326 = vector.shape_cast %325 : vector<1x32x1xf32> to vector<32x1xf32>
    %327 = vector.broadcast %324 : vector<1x1xf32> to vector<32x1xf32>
    %328 = arith.mulf %327, %326 : vector<32x1xf32>
    %329 = arith.addf %319, %328 : vector<32x1xf32>
    %330 = vector.extract_strided_slice %329 {offsets = [1, 0], sizes = [1, 1], strides = [1, 1]} : vector<32x1xf32> to vector<1x1xf32>
    %cst_107 = arith.constant 1.000000e+00 : f32
    %331 = vector.broadcast %cst_107 : f32 to vector<1x1xf32>
    %332 = arith.cmpf ogt, %330, %331 : vector<1x1xf32>
    %333 = arith.extui %332 : vector<1x1xi1> to vector<1x1xi32>
    %334 = arith.sitofp %333 : vector<1x1xi32> to vector<1x1xf32>
    %c1_108 = arith.constant 1 : index
    %c0_109 = arith.constant 0 : index
    %c0_110 = arith.constant 0 : index
    %335 = vector.load %arg5[%c1_108, %c0_109, %c0_110] : memref<32x32x1xf32, #tpu.memory_space<vmem>>, vector<1x32x1xf32>
    %336 = vector.shape_cast %335 : vector<1x32x1xf32> to vector<32x1xf32>
    %337 = vector.broadcast %334 : vector<1x1xf32> to vector<32x1xf32>
    %338 = arith.mulf %337, %336 : vector<32x1xf32>
    %339 = arith.addf %329, %338 : vector<32x1xf32>
    %340 = vector.extract_strided_slice %339 {offsets = [2, 0], sizes = [1, 1], strides = [1, 1]} : vector<32x1xf32> to vector<1x1xf32>
    %cst_111 = arith.constant 1.000000e+00 : f32
    %341 = vector.broadcast %cst_111 : f32 to vector<1x1xf32>
    %342 = arith.cmpf ogt, %340, %341 : vector<1x1xf32>
    %343 = arith.extui %342 : vector<1x1xi1> to vector<1x1xi32>
    %344 = arith.sitofp %343 : vector<1x1xi32> to vector<1x1xf32>
    %c2_112 = arith.constant 2 : index
    %c0_113 = arith.constant 0 : index
    %c0_114 = arith.constant 0 : index
    %345 = vector.load %arg5[%c2_112, %c0_113, %c0_114] : memref<32x32x1xf32, #tpu.memory_space<vmem>>, vector<1x32x1xf32>
    %346 = vector.shape_cast %345 : vector<1x32x1xf32> to vector<32x1xf32>
    %347 = vector.broadcast %344 : vector<1x1xf32> to vector<32x1xf32>
    %348 = arith.mulf %347, %346 : vector<32x1xf32>
    %349 = arith.addf %339, %348 : vector<32x1xf32>
    %350 = vector.extract_strided_slice %349 {offsets = [3, 0], sizes = [1, 1], strides = [1, 1]} : vector<32x1xf32> to vector<1x1xf32>
    %cst_115 = arith.constant 1.000000e+00 : f32
    %351 = vector.broadcast %cst_115 : f32 to vector<1x1xf32>
    %352 = arith.cmpf ogt, %350, %351 : vector<1x1xf32>
    %353 = arith.extui %352 : vector<1x1xi1> to vector<1x1xi32>
    %354 = arith.sitofp %353 : vector<1x1xi32> to vector<1x1xf32>
    %c3_116 = arith.constant 3 : index
    %c0_117 = arith.constant 0 : index
    %c0_118 = arith.constant 0 : index
    %355 = vector.load %arg5[%c3_116, %c0_117, %c0_118] : memref<32x32x1xf32, #tpu.memory_space<vmem>>, vector<1x32x1xf32>
    %356 = vector.shape_cast %355 : vector<1x32x1xf32> to vector<32x1xf32>
    %357 = vector.broadcast %354 : vector<1x1xf32> to vector<32x1xf32>
    %358 = arith.mulf %357, %356 : vector<32x1xf32>
    %359 = arith.addf %349, %358 : vector<32x1xf32>
    %360 = vector.extract_strided_slice %359 {offsets = [4, 0], sizes = [1, 1], strides = [1, 1]} : vector<32x1xf32> to vector<1x1xf32>
    %cst_119 = arith.constant 1.000000e+00 : f32
    %361 = vector.broadcast %cst_119 : f32 to vector<1x1xf32>
    %362 = arith.cmpf ogt, %360, %361 : vector<1x1xf32>
    %363 = arith.extui %362 : vector<1x1xi1> to vector<1x1xi32>
    %364 = arith.sitofp %363 : vector<1x1xi32> to vector<1x1xf32>
    %c4_120 = arith.constant 4 : index
    %c0_121 = arith.constant 0 : index
    %c0_122 = arith.constant 0 : index
    %365 = vector.load %arg5[%c4_120, %c0_121, %c0_122] : memref<32x32x1xf32, #tpu.memory_space<vmem>>, vector<1x32x1xf32>
    %366 = vector.shape_cast %365 : vector<1x32x1xf32> to vector<32x1xf32>
    %367 = vector.broadcast %364 : vector<1x1xf32> to vector<32x1xf32>
    %368 = arith.mulf %367, %366 : vector<32x1xf32>
    %369 = arith.addf %359, %368 : vector<32x1xf32>
    %370 = vector.extract_strided_slice %369 {offsets = [5, 0], sizes = [1, 1], strides = [1, 1]} : vector<32x1xf32> to vector<1x1xf32>
    %cst_123 = arith.constant 1.000000e+00 : f32
    %371 = vector.broadcast %cst_123 : f32 to vector<1x1xf32>
    %372 = arith.cmpf ogt, %370, %371 : vector<1x1xf32>
    %373 = arith.extui %372 : vector<1x1xi1> to vector<1x1xi32>
    %374 = arith.sitofp %373 : vector<1x1xi32> to vector<1x1xf32>
    %c5_124 = arith.constant 5 : index
    %c0_125 = arith.constant 0 : index
    %c0_126 = arith.constant 0 : index
    %375 = vector.load %arg5[%c5_124, %c0_125, %c0_126] : memref<32x32x1xf32, #tpu.memory_space<vmem>>, vector<1x32x1xf32>
    %376 = vector.shape_cast %375 : vector<1x32x1xf32> to vector<32x1xf32>
    %377 = vector.broadcast %374 : vector<1x1xf32> to vector<32x1xf32>
    %378 = arith.mulf %377, %376 : vector<32x1xf32>
    %379 = arith.addf %369, %378 : vector<32x1xf32>
    %380 = vector.extract_strided_slice %379 {offsets = [6, 0], sizes = [1, 1], strides = [1, 1]} : vector<32x1xf32> to vector<1x1xf32>
    %cst_127 = arith.constant 1.000000e+00 : f32
    %381 = vector.broadcast %cst_127 : f32 to vector<1x1xf32>
    %382 = arith.cmpf ogt, %380, %381 : vector<1x1xf32>
    %383 = arith.extui %382 : vector<1x1xi1> to vector<1x1xi32>
    %384 = arith.sitofp %383 : vector<1x1xi32> to vector<1x1xf32>
    %c6_128 = arith.constant 6 : index
    %c0_129 = arith.constant 0 : index
    %c0_130 = arith.constant 0 : index
    %385 = vector.load %arg5[%c6_128, %c0_129, %c0_130] : memref<32x32x1xf32, #tpu.memory_space<vmem>>, vector<1x32x1xf32>
    %386 = vector.shape_cast %385 : vector<1x32x1xf32> to vector<32x1xf32>
    %387 = vector.broadcast %384 : vector<1x1xf32> to vector<32x1xf32>
    %388 = arith.mulf %387, %386 : vector<32x1xf32>
    %389 = arith.addf %379, %388 : vector<32x1xf32>
    %390 = vector.extract_strided_slice %389 {offsets = [7, 0], sizes = [1, 1], strides = [1, 1]} : vector<32x1xf32> to vector<1x1xf32>
    %cst_131 = arith.constant 1.000000e+00 : f32
    %391 = vector.broadcast %cst_131 : f32 to vector<1x1xf32>
    %392 = arith.cmpf ogt, %390, %391 : vector<1x1xf32>
    %393 = arith.extui %392 : vector<1x1xi1> to vector<1x1xi32>
    %394 = arith.sitofp %393 : vector<1x1xi32> to vector<1x1xf32>
    %c7_132 = arith.constant 7 : index
    %c0_133 = arith.constant 0 : index
    %c0_134 = arith.constant 0 : index
    %395 = vector.load %arg5[%c7_132, %c0_133, %c0_134] : memref<32x32x1xf32, #tpu.memory_space<vmem>>, vector<1x32x1xf32>
    %396 = vector.shape_cast %395 : vector<1x32x1xf32> to vector<32x1xf32>
    %397 = vector.broadcast %394 : vector<1x1xf32> to vector<32x1xf32>
    %398 = arith.mulf %397, %396 : vector<32x1xf32>
    %399 = arith.addf %389, %398 : vector<32x1xf32>
    %400 = vector.extract_strided_slice %399 {offsets = [8, 0], sizes = [1, 1], strides = [1, 1]} : vector<32x1xf32> to vector<1x1xf32>
    %cst_135 = arith.constant 1.000000e+00 : f32
    %401 = vector.broadcast %cst_135 : f32 to vector<1x1xf32>
    %402 = arith.cmpf ogt, %400, %401 : vector<1x1xf32>
    %403 = arith.extui %402 : vector<1x1xi1> to vector<1x1xi32>
    %404 = arith.sitofp %403 : vector<1x1xi32> to vector<1x1xf32>
    %c8_136 = arith.constant 8 : index
    %c0_137 = arith.constant 0 : index
    %c0_138 = arith.constant 0 : index
    %405 = vector.load %arg5[%c8_136, %c0_137, %c0_138] : memref<32x32x1xf32, #tpu.memory_space<vmem>>, vector<1x32x1xf32>
    %406 = vector.shape_cast %405 : vector<1x32x1xf32> to vector<32x1xf32>
    %407 = vector.broadcast %404 : vector<1x1xf32> to vector<32x1xf32>
    %408 = arith.mulf %407, %406 : vector<32x1xf32>
    %409 = arith.addf %399, %408 : vector<32x1xf32>
    %410 = vector.extract_strided_slice %409 {offsets = [9, 0], sizes = [1, 1], strides = [1, 1]} : vector<32x1xf32> to vector<1x1xf32>
    %cst_139 = arith.constant 1.000000e+00 : f32
    %411 = vector.broadcast %cst_139 : f32 to vector<1x1xf32>
    %412 = arith.cmpf ogt, %410, %411 : vector<1x1xf32>
    %413 = arith.extui %412 : vector<1x1xi1> to vector<1x1xi32>
    %414 = arith.sitofp %413 : vector<1x1xi32> to vector<1x1xf32>
    %c9_140 = arith.constant 9 : index
    %c0_141 = arith.constant 0 : index
    %c0_142 = arith.constant 0 : index
    %415 = vector.load %arg5[%c9_140, %c0_141, %c0_142] : memref<32x32x1xf32, #tpu.memory_space<vmem>>, vector<1x32x1xf32>
    %416 = vector.shape_cast %415 : vector<1x32x1xf32> to vector<32x1xf32>
    %417 = vector.broadcast %414 : vector<1x1xf32> to vector<32x1xf32>
    %418 = arith.mulf %417, %416 : vector<32x1xf32>
    %419 = arith.addf %409, %418 : vector<32x1xf32>
    %420 = vector.extract_strided_slice %419 {offsets = [10, 0], sizes = [1, 1], strides = [1, 1]} : vector<32x1xf32> to vector<1x1xf32>
    %cst_143 = arith.constant 1.000000e+00 : f32
    %421 = vector.broadcast %cst_143 : f32 to vector<1x1xf32>
    %422 = arith.cmpf ogt, %420, %421 : vector<1x1xf32>
    %423 = arith.extui %422 : vector<1x1xi1> to vector<1x1xi32>
    %424 = arith.sitofp %423 : vector<1x1xi32> to vector<1x1xf32>
    %c10_144 = arith.constant 10 : index
    %c0_145 = arith.constant 0 : index
    %c0_146 = arith.constant 0 : index
    %425 = vector.load %arg5[%c10_144, %c0_145, %c0_146] : memref<32x32x1xf32, #tpu.memory_space<vmem>>, vector<1x32x1xf32>
    %426 = vector.shape_cast %425 : vector<1x32x1xf32> to vector<32x1xf32>
    %427 = vector.broadcast %424 : vector<1x1xf32> to vector<32x1xf32>
    %428 = arith.mulf %427, %426 : vector<32x1xf32>
    %429 = arith.addf %419, %428 : vector<32x1xf32>
    %430 = vector.extract_strided_slice %429 {offsets = [11, 0], sizes = [1, 1], strides = [1, 1]} : vector<32x1xf32> to vector<1x1xf32>
    %cst_147 = arith.constant 1.000000e+00 : f32
    %431 = vector.broadcast %cst_147 : f32 to vector<1x1xf32>
    %432 = arith.cmpf ogt, %430, %431 : vector<1x1xf32>
    %433 = arith.extui %432 : vector<1x1xi1> to vector<1x1xi32>
    %434 = arith.sitofp %433 : vector<1x1xi32> to vector<1x1xf32>
    %c11_148 = arith.constant 11 : index
    %c0_149 = arith.constant 0 : index
    %c0_150 = arith.constant 0 : index
    %435 = vector.load %arg5[%c11_148, %c0_149, %c0_150] : memref<32x32x1xf32, #tpu.memory_space<vmem>>, vector<1x32x1xf32>
    %436 = vector.shape_cast %435 : vector<1x32x1xf32> to vector<32x1xf32>
    %437 = vector.broadcast %434 : vector<1x1xf32> to vector<32x1xf32>
    %438 = arith.mulf %437, %436 : vector<32x1xf32>
    %439 = arith.addf %429, %438 : vector<32x1xf32>
    %440 = vector.extract_strided_slice %439 {offsets = [12, 0], sizes = [1, 1], strides = [1, 1]} : vector<32x1xf32> to vector<1x1xf32>
    %cst_151 = arith.constant 1.000000e+00 : f32
    %441 = vector.broadcast %cst_151 : f32 to vector<1x1xf32>
    %442 = arith.cmpf ogt, %440, %441 : vector<1x1xf32>
    %443 = arith.extui %442 : vector<1x1xi1> to vector<1x1xi32>
    %444 = arith.sitofp %443 : vector<1x1xi32> to vector<1x1xf32>
    %c12_152 = arith.constant 12 : index
    %c0_153 = arith.constant 0 : index
    %c0_154 = arith.constant 0 : index
    %445 = vector.load %arg5[%c12_152, %c0_153, %c0_154] : memref<32x32x1xf32, #tpu.memory_space<vmem>>, vector<1x32x1xf32>
    %446 = vector.shape_cast %445 : vector<1x32x1xf32> to vector<32x1xf32>
    %447 = vector.broadcast %444 : vector<1x1xf32> to vector<32x1xf32>
    %448 = arith.mulf %447, %446 : vector<32x1xf32>
    %449 = arith.addf %439, %448 : vector<32x1xf32>
    %450 = vector.extract_strided_slice %449 {offsets = [13, 0], sizes = [1, 1], strides = [1, 1]} : vector<32x1xf32> to vector<1x1xf32>
    %cst_155 = arith.constant 1.000000e+00 : f32
    %451 = vector.broadcast %cst_155 : f32 to vector<1x1xf32>
    %452 = arith.cmpf ogt, %450, %451 : vector<1x1xf32>
    %453 = arith.extui %452 : vector<1x1xi1> to vector<1x1xi32>
    %454 = arith.sitofp %453 : vector<1x1xi32> to vector<1x1xf32>
    %c13_156 = arith.constant 13 : index
    %c0_157 = arith.constant 0 : index
    %c0_158 = arith.constant 0 : index
    %455 = vector.load %arg5[%c13_156, %c0_157, %c0_158] : memref<32x32x1xf32, #tpu.memory_space<vmem>>, vector<1x32x1xf32>
    %456 = vector.shape_cast %455 : vector<1x32x1xf32> to vector<32x1xf32>
    %457 = vector.broadcast %454 : vector<1x1xf32> to vector<32x1xf32>
    %458 = arith.mulf %457, %456 : vector<32x1xf32>
    %459 = arith.addf %449, %458 : vector<32x1xf32>
    %460 = vector.extract_strided_slice %459 {offsets = [14, 0], sizes = [1, 1], strides = [1, 1]} : vector<32x1xf32> to vector<1x1xf32>
    %cst_159 = arith.constant 1.000000e+00 : f32
    %461 = vector.broadcast %cst_159 : f32 to vector<1x1xf32>
    %462 = arith.cmpf ogt, %460, %461 : vector<1x1xf32>
    %463 = arith.extui %462 : vector<1x1xi1> to vector<1x1xi32>
    %464 = arith.sitofp %463 : vector<1x1xi32> to vector<1x1xf32>
    %c14_160 = arith.constant 14 : index
    %c0_161 = arith.constant 0 : index
    %c0_162 = arith.constant 0 : index
    %465 = vector.load %arg5[%c14_160, %c0_161, %c0_162] : memref<32x32x1xf32, #tpu.memory_space<vmem>>, vector<1x32x1xf32>
    %466 = vector.shape_cast %465 : vector<1x32x1xf32> to vector<32x1xf32>
    %467 = vector.broadcast %464 : vector<1x1xf32> to vector<32x1xf32>
    %468 = arith.mulf %467, %466 : vector<32x1xf32>
    %469 = arith.addf %459, %468 : vector<32x1xf32>
    %470 = vector.extract_strided_slice %469 {offsets = [15, 0], sizes = [1, 1], strides = [1, 1]} : vector<32x1xf32> to vector<1x1xf32>
    %cst_163 = arith.constant 1.000000e+00 : f32
    %471 = vector.broadcast %cst_163 : f32 to vector<1x1xf32>
    %472 = arith.cmpf ogt, %470, %471 : vector<1x1xf32>
    %473 = arith.extui %472 : vector<1x1xi1> to vector<1x1xi32>
    %474 = arith.sitofp %473 : vector<1x1xi32> to vector<1x1xf32>
    %c15_164 = arith.constant 15 : index
    %c0_165 = arith.constant 0 : index
    %c0_166 = arith.constant 0 : index
    %475 = vector.load %arg5[%c15_164, %c0_165, %c0_166] : memref<32x32x1xf32, #tpu.memory_space<vmem>>, vector<1x32x1xf32>
    %476 = vector.shape_cast %475 : vector<1x32x1xf32> to vector<32x1xf32>
    %477 = vector.broadcast %474 : vector<1x1xf32> to vector<32x1xf32>
    %478 = arith.mulf %477, %476 : vector<32x1xf32>
    %479 = arith.addf %469, %478 : vector<32x1xf32>
    %480 = vector.extract_strided_slice %479 {offsets = [16, 0], sizes = [1, 1], strides = [1, 1]} : vector<32x1xf32> to vector<1x1xf32>
    %cst_167 = arith.constant 1.000000e+00 : f32
    %481 = vector.broadcast %cst_167 : f32 to vector<1x1xf32>
    %482 = arith.cmpf ogt, %480, %481 : vector<1x1xf32>
    %483 = arith.extui %482 : vector<1x1xi1> to vector<1x1xi32>
    %484 = arith.sitofp %483 : vector<1x1xi32> to vector<1x1xf32>
    %c16_168 = arith.constant 16 : index
    %c0_169 = arith.constant 0 : index
    %c0_170 = arith.constant 0 : index
    %485 = vector.load %arg5[%c16_168, %c0_169, %c0_170] : memref<32x32x1xf32, #tpu.memory_space<vmem>>, vector<1x32x1xf32>
    %486 = vector.shape_cast %485 : vector<1x32x1xf32> to vector<32x1xf32>
    %487 = vector.broadcast %484 : vector<1x1xf32> to vector<32x1xf32>
    %488 = arith.mulf %487, %486 : vector<32x1xf32>
    %489 = arith.addf %479, %488 : vector<32x1xf32>
    %490 = vector.extract_strided_slice %489 {offsets = [17, 0], sizes = [1, 1], strides = [1, 1]} : vector<32x1xf32> to vector<1x1xf32>
    %cst_171 = arith.constant 1.000000e+00 : f32
    %491 = vector.broadcast %cst_171 : f32 to vector<1x1xf32>
    %492 = arith.cmpf ogt, %490, %491 : vector<1x1xf32>
    %493 = arith.extui %492 : vector<1x1xi1> to vector<1x1xi32>
    %494 = arith.sitofp %493 : vector<1x1xi32> to vector<1x1xf32>
    %c17_172 = arith.constant 17 : index
    %c0_173 = arith.constant 0 : index
    %c0_174 = arith.constant 0 : index
    %495 = vector.load %arg5[%c17_172, %c0_173, %c0_174] : memref<32x32x1xf32, #tpu.memory_space<vmem>>, vector<1x32x1xf32>
    %496 = vector.shape_cast %495 : vector<1x32x1xf32> to vector<32x1xf32>
    %497 = vector.broadcast %494 : vector<1x1xf32> to vector<32x1xf32>
    %498 = arith.mulf %497, %496 : vector<32x1xf32>
    %499 = arith.addf %489, %498 : vector<32x1xf32>
    %500 = vector.extract_strided_slice %499 {offsets = [18, 0], sizes = [1, 1], strides = [1, 1]} : vector<32x1xf32> to vector<1x1xf32>
    %cst_175 = arith.constant 1.000000e+00 : f32
    %501 = vector.broadcast %cst_175 : f32 to vector<1x1xf32>
    %502 = arith.cmpf ogt, %500, %501 : vector<1x1xf32>
    %503 = arith.extui %502 : vector<1x1xi1> to vector<1x1xi32>
    %504 = arith.sitofp %503 : vector<1x1xi32> to vector<1x1xf32>
    %c18_176 = arith.constant 18 : index
    %c0_177 = arith.constant 0 : index
    %c0_178 = arith.constant 0 : index
    %505 = vector.load %arg5[%c18_176, %c0_177, %c0_178] : memref<32x32x1xf32, #tpu.memory_space<vmem>>, vector<1x32x1xf32>
    %506 = vector.shape_cast %505 : vector<1x32x1xf32> to vector<32x1xf32>
    %507 = vector.broadcast %504 : vector<1x1xf32> to vector<32x1xf32>
    %508 = arith.mulf %507, %506 : vector<32x1xf32>
    %509 = arith.addf %499, %508 : vector<32x1xf32>
    %510 = vector.extract_strided_slice %509 {offsets = [19, 0], sizes = [1, 1], strides = [1, 1]} : vector<32x1xf32> to vector<1x1xf32>
    %cst_179 = arith.constant 1.000000e+00 : f32
    %511 = vector.broadcast %cst_179 : f32 to vector<1x1xf32>
    %512 = arith.cmpf ogt, %510, %511 : vector<1x1xf32>
    %513 = arith.extui %512 : vector<1x1xi1> to vector<1x1xi32>
    %514 = arith.sitofp %513 : vector<1x1xi32> to vector<1x1xf32>
    %c19_180 = arith.constant 19 : index
    %c0_181 = arith.constant 0 : index
    %c0_182 = arith.constant 0 : index
    %515 = vector.load %arg5[%c19_180, %c0_181, %c0_182] : memref<32x32x1xf32, #tpu.memory_space<vmem>>, vector<1x32x1xf32>
    %516 = vector.shape_cast %515 : vector<1x32x1xf32> to vector<32x1xf32>
    %517 = vector.broadcast %514 : vector<1x1xf32> to vector<32x1xf32>
    %518 = arith.mulf %517, %516 : vector<32x1xf32>
    %519 = arith.addf %509, %518 : vector<32x1xf32>
    %520 = vector.extract_strided_slice %519 {offsets = [20, 0], sizes = [1, 1], strides = [1, 1]} : vector<32x1xf32> to vector<1x1xf32>
    %cst_183 = arith.constant 1.000000e+00 : f32
    %521 = vector.broadcast %cst_183 : f32 to vector<1x1xf32>
    %522 = arith.cmpf ogt, %520, %521 : vector<1x1xf32>
    %523 = arith.extui %522 : vector<1x1xi1> to vector<1x1xi32>
    %524 = arith.sitofp %523 : vector<1x1xi32> to vector<1x1xf32>
    %c20_184 = arith.constant 20 : index
    %c0_185 = arith.constant 0 : index
    %c0_186 = arith.constant 0 : index
    %525 = vector.load %arg5[%c20_184, %c0_185, %c0_186] : memref<32x32x1xf32, #tpu.memory_space<vmem>>, vector<1x32x1xf32>
    %526 = vector.shape_cast %525 : vector<1x32x1xf32> to vector<32x1xf32>
    %527 = vector.broadcast %524 : vector<1x1xf32> to vector<32x1xf32>
    %528 = arith.mulf %527, %526 : vector<32x1xf32>
    %529 = arith.addf %519, %528 : vector<32x1xf32>
    %530 = vector.extract_strided_slice %529 {offsets = [21, 0], sizes = [1, 1], strides = [1, 1]} : vector<32x1xf32> to vector<1x1xf32>
    %cst_187 = arith.constant 1.000000e+00 : f32
    %531 = vector.broadcast %cst_187 : f32 to vector<1x1xf32>
    %532 = arith.cmpf ogt, %530, %531 : vector<1x1xf32>
    %533 = arith.extui %532 : vector<1x1xi1> to vector<1x1xi32>
    %534 = arith.sitofp %533 : vector<1x1xi32> to vector<1x1xf32>
    %c21_188 = arith.constant 21 : index
    %c0_189 = arith.constant 0 : index
    %c0_190 = arith.constant 0 : index
    %535 = vector.load %arg5[%c21_188, %c0_189, %c0_190] : memref<32x32x1xf32, #tpu.memory_space<vmem>>, vector<1x32x1xf32>
    %536 = vector.shape_cast %535 : vector<1x32x1xf32> to vector<32x1xf32>
    %537 = vector.broadcast %534 : vector<1x1xf32> to vector<32x1xf32>
    %538 = arith.mulf %537, %536 : vector<32x1xf32>
    %539 = arith.addf %529, %538 : vector<32x1xf32>
    %540 = vector.extract_strided_slice %539 {offsets = [22, 0], sizes = [1, 1], strides = [1, 1]} : vector<32x1xf32> to vector<1x1xf32>
    %cst_191 = arith.constant 1.000000e+00 : f32
    %541 = vector.broadcast %cst_191 : f32 to vector<1x1xf32>
    %542 = arith.cmpf ogt, %540, %541 : vector<1x1xf32>
    %543 = arith.extui %542 : vector<1x1xi1> to vector<1x1xi32>
    %544 = arith.sitofp %543 : vector<1x1xi32> to vector<1x1xf32>
    %c22_192 = arith.constant 22 : index
    %c0_193 = arith.constant 0 : index
    %c0_194 = arith.constant 0 : index
    %545 = vector.load %arg5[%c22_192, %c0_193, %c0_194] : memref<32x32x1xf32, #tpu.memory_space<vmem>>, vector<1x32x1xf32>
    %546 = vector.shape_cast %545 : vector<1x32x1xf32> to vector<32x1xf32>
    %547 = vector.broadcast %544 : vector<1x1xf32> to vector<32x1xf32>
    %548 = arith.mulf %547, %546 : vector<32x1xf32>
    %549 = arith.addf %539, %548 : vector<32x1xf32>
    %550 = vector.extract_strided_slice %549 {offsets = [23, 0], sizes = [1, 1], strides = [1, 1]} : vector<32x1xf32> to vector<1x1xf32>
    %cst_195 = arith.constant 1.000000e+00 : f32
    %551 = vector.broadcast %cst_195 : f32 to vector<1x1xf32>
    %552 = arith.cmpf ogt, %550, %551 : vector<1x1xf32>
    %553 = arith.extui %552 : vector<1x1xi1> to vector<1x1xi32>
    %554 = arith.sitofp %553 : vector<1x1xi32> to vector<1x1xf32>
    %c23_196 = arith.constant 23 : index
    %c0_197 = arith.constant 0 : index
    %c0_198 = arith.constant 0 : index
    %555 = vector.load %arg5[%c23_196, %c0_197, %c0_198] : memref<32x32x1xf32, #tpu.memory_space<vmem>>, vector<1x32x1xf32>
    %556 = vector.shape_cast %555 : vector<1x32x1xf32> to vector<32x1xf32>
    %557 = vector.broadcast %554 : vector<1x1xf32> to vector<32x1xf32>
    %558 = arith.mulf %557, %556 : vector<32x1xf32>
    %559 = arith.addf %549, %558 : vector<32x1xf32>
    %560 = vector.extract_strided_slice %559 {offsets = [24, 0], sizes = [1, 1], strides = [1, 1]} : vector<32x1xf32> to vector<1x1xf32>
    %cst_199 = arith.constant 1.000000e+00 : f32
    %561 = vector.broadcast %cst_199 : f32 to vector<1x1xf32>
    %562 = arith.cmpf ogt, %560, %561 : vector<1x1xf32>
    %563 = arith.extui %562 : vector<1x1xi1> to vector<1x1xi32>
    %564 = arith.sitofp %563 : vector<1x1xi32> to vector<1x1xf32>
    %c24_200 = arith.constant 24 : index
    %c0_201 = arith.constant 0 : index
    %c0_202 = arith.constant 0 : index
    %565 = vector.load %arg5[%c24_200, %c0_201, %c0_202] : memref<32x32x1xf32, #tpu.memory_space<vmem>>, vector<1x32x1xf32>
    %566 = vector.shape_cast %565 : vector<1x32x1xf32> to vector<32x1xf32>
    %567 = vector.broadcast %564 : vector<1x1xf32> to vector<32x1xf32>
    %568 = arith.mulf %567, %566 : vector<32x1xf32>
    %569 = arith.addf %559, %568 : vector<32x1xf32>
    %570 = vector.extract_strided_slice %569 {offsets = [25, 0], sizes = [1, 1], strides = [1, 1]} : vector<32x1xf32> to vector<1x1xf32>
    %cst_203 = arith.constant 1.000000e+00 : f32
    %571 = vector.broadcast %cst_203 : f32 to vector<1x1xf32>
    %572 = arith.cmpf ogt, %570, %571 : vector<1x1xf32>
    %573 = arith.extui %572 : vector<1x1xi1> to vector<1x1xi32>
    %574 = arith.sitofp %573 : vector<1x1xi32> to vector<1x1xf32>
    %c25_204 = arith.constant 25 : index
    %c0_205 = arith.constant 0 : index
    %c0_206 = arith.constant 0 : index
    %575 = vector.load %arg5[%c25_204, %c0_205, %c0_206] : memref<32x32x1xf32, #tpu.memory_space<vmem>>, vector<1x32x1xf32>
    %576 = vector.shape_cast %575 : vector<1x32x1xf32> to vector<32x1xf32>
    %577 = vector.broadcast %574 : vector<1x1xf32> to vector<32x1xf32>
    %578 = arith.mulf %577, %576 : vector<32x1xf32>
    %579 = arith.addf %569, %578 : vector<32x1xf32>
    %580 = vector.extract_strided_slice %579 {offsets = [26, 0], sizes = [1, 1], strides = [1, 1]} : vector<32x1xf32> to vector<1x1xf32>
    %cst_207 = arith.constant 1.000000e+00 : f32
    %581 = vector.broadcast %cst_207 : f32 to vector<1x1xf32>
    %582 = arith.cmpf ogt, %580, %581 : vector<1x1xf32>
    %583 = arith.extui %582 : vector<1x1xi1> to vector<1x1xi32>
    %584 = arith.sitofp %583 : vector<1x1xi32> to vector<1x1xf32>
    %c26_208 = arith.constant 26 : index
    %c0_209 = arith.constant 0 : index
    %c0_210 = arith.constant 0 : index
    %585 = vector.load %arg5[%c26_208, %c0_209, %c0_210] : memref<32x32x1xf32, #tpu.memory_space<vmem>>, vector<1x32x1xf32>
    %586 = vector.shape_cast %585 : vector<1x32x1xf32> to vector<32x1xf32>
    %587 = vector.broadcast %584 : vector<1x1xf32> to vector<32x1xf32>
    %588 = arith.mulf %587, %586 : vector<32x1xf32>
    %589 = arith.addf %579, %588 : vector<32x1xf32>
    %590 = vector.extract_strided_slice %589 {offsets = [27, 0], sizes = [1, 1], strides = [1, 1]} : vector<32x1xf32> to vector<1x1xf32>
    %cst_211 = arith.constant 1.000000e+00 : f32
    %591 = vector.broadcast %cst_211 : f32 to vector<1x1xf32>
    %592 = arith.cmpf ogt, %590, %591 : vector<1x1xf32>
    %593 = arith.extui %592 : vector<1x1xi1> to vector<1x1xi32>
    %594 = arith.sitofp %593 : vector<1x1xi32> to vector<1x1xf32>
    %c27_212 = arith.constant 27 : index
    %c0_213 = arith.constant 0 : index
    %c0_214 = arith.constant 0 : index
    %595 = vector.load %arg5[%c27_212, %c0_213, %c0_214] : memref<32x32x1xf32, #tpu.memory_space<vmem>>, vector<1x32x1xf32>
    %596 = vector.shape_cast %595 : vector<1x32x1xf32> to vector<32x1xf32>
    %597 = vector.broadcast %594 : vector<1x1xf32> to vector<32x1xf32>
    %598 = arith.mulf %597, %596 : vector<32x1xf32>
    %599 = arith.addf %589, %598 : vector<32x1xf32>
    %600 = vector.extract_strided_slice %599 {offsets = [28, 0], sizes = [1, 1], strides = [1, 1]} : vector<32x1xf32> to vector<1x1xf32>
    %cst_215 = arith.constant 1.000000e+00 : f32
    %601 = vector.broadcast %cst_215 : f32 to vector<1x1xf32>
    %602 = arith.cmpf ogt, %600, %601 : vector<1x1xf32>
    %603 = arith.extui %602 : vector<1x1xi1> to vector<1x1xi32>
    %604 = arith.sitofp %603 : vector<1x1xi32> to vector<1x1xf32>
    %c28_216 = arith.constant 28 : index
    %c0_217 = arith.constant 0 : index
    %c0_218 = arith.constant 0 : index
    %605 = vector.load %arg5[%c28_216, %c0_217, %c0_218] : memref<32x32x1xf32, #tpu.memory_space<vmem>>, vector<1x32x1xf32>
    %606 = vector.shape_cast %605 : vector<1x32x1xf32> to vector<32x1xf32>
    %607 = vector.broadcast %604 : vector<1x1xf32> to vector<32x1xf32>
    %608 = arith.mulf %607, %606 : vector<32x1xf32>
    %609 = arith.addf %599, %608 : vector<32x1xf32>
    %610 = vector.extract_strided_slice %609 {offsets = [29, 0], sizes = [1, 1], strides = [1, 1]} : vector<32x1xf32> to vector<1x1xf32>
    %cst_219 = arith.constant 1.000000e+00 : f32
    %611 = vector.broadcast %cst_219 : f32 to vector<1x1xf32>
    %612 = arith.cmpf ogt, %610, %611 : vector<1x1xf32>
    %613 = arith.extui %612 : vector<1x1xi1> to vector<1x1xi32>
    %614 = arith.sitofp %613 : vector<1x1xi32> to vector<1x1xf32>
    %c29_220 = arith.constant 29 : index
    %c0_221 = arith.constant 0 : index
    %c0_222 = arith.constant 0 : index
    %615 = vector.load %arg5[%c29_220, %c0_221, %c0_222] : memref<32x32x1xf32, #tpu.memory_space<vmem>>, vector<1x32x1xf32>
    %616 = vector.shape_cast %615 : vector<1x32x1xf32> to vector<32x1xf32>
    %617 = vector.broadcast %614 : vector<1x1xf32> to vector<32x1xf32>
    %618 = arith.mulf %617, %616 : vector<32x1xf32>
    %619 = arith.addf %609, %618 : vector<32x1xf32>
    %cst_223 = arith.constant 1.000000e+00 : f32
    %620 = vector.broadcast %cst_223 : f32 to vector<32x1xf32>
    %621 = arith.cmpf ogt, %619, %620 : vector<32x1xf32>
    %622 = arith.extui %621 : vector<32x1xi1> to vector<32x1xi32>
    %623 = arith.sitofp %622 : vector<32x1xi32> to vector<32x1xf32>
    %cst_224 = arith.constant 0.000000e+00 : f32
    %624 = vector.broadcast %cst_224 : f32 to vector<32x1xf32>
    %625 = arith.select %3, %623, %624 : vector<32x1xi1>, vector<32x1xf32>
    %c0_225 = arith.constant 0 : index
    %c0_226 = arith.constant 0 : index
    %626 = vector.load %arg6[%c0_225, %c0_226] : memref<32x1xf32, #tpu.memory_space<vmem>>, vector<32x1xf32>
    tpu.vector_store %arg6[%c0_225, %c0_226], %625 {strides = array<i32>} : memref<32x1xf32, #tpu.memory_space<vmem>>, vector<32x1xf32>,
    return
  }
}

</mosaic_0001>

<llo_original>
// kernel: slayer_forward.1
$region0: #{slayer_forward.1}
  #allocation0 [shape = 'u32[]', space=smem, size = 0x4, offset = 0x4, fixed_abs, tag = 'smem constant byte address 0x4 - core index']
  #allocation1 [shape = 'u32[144,128]{1,0:T(1,128)}', space=vmem, size = 0x12000, scoped, tag = 'internal scratch']
  %s0 = inlined_call_operand.vmem [shape: f32[250,32], index: 0, kind: input, shape index: {}]
  %s1 = inlined_call_operand.vmem [shape: f32[25,250], index: 1, kind: input, shape index: {}]
  %s2 = inlined_call_operand.vmem [shape: f32[25,1], index: 2, kind: input, shape index: {}]
  %s3 = inlined_call_operand.vmem [shape: f32[32,32], index: 3, kind: input, shape index: {}]
  %s4 = inlined_call_operand.vmem [shape: f32[32,32,25], index: 4, kind: input, shape index: {}]
  %s5 = inlined_call_operand.vmem [shape: f32[32,32,1], index: 5, kind: input, shape index: {}]
  %s6 = inlined_call_operand.vmem [shape: f32[32,1], index: 6, kind: output, shape index: {}]
  %s7 = sld [smem:[#allocation0]]
  $region34: #{slayer_forward.1} parent=0
    _
  %s9 = ssub.s32 1, %s7
  %s10 = scalar_select 0, %s9, %s7
  // Predicated region
  $region2: #{slayer_forward.1} parent=0 // pred_check
    _
  $region3: #{slayer_forward.1} parent=0 // pred_check_branch
    %12 = sbr.rel (0) target = $region5
  $region4: #{slayer_forward.1} parent=0 // pred_region
    _
  $region5: #{slayer_forward.1} parent=0 // pred_fallthru
    _
  // Predicated region
  $region6: #{slayer_forward.1} parent=0 // pred_check
    _
  $region7: #{slayer_forward.1} parent=0 // pred_check_branch
    %14 = sbr.rel (0) target = $region9
  $region8: #{slayer_forward.1} parent=0 // pred_region
    _
  $region9: #{slayer_forward.1} parent=0 // pred_fallthru
    _
  // Predicated region
  $region10: #{slayer_forward.1} parent=0 // pred_check
    _
  $region11: #{slayer_forward.1} parent=0 // pred_check_branch
    %16 = sbr.rel (0) target = $region13
  $region12: #{slayer_forward.1} parent=0 // pred_region
    _
  $region13: #{slayer_forward.1} parent=0 // pred_fallthru
    _
  // Predicated region
  $region14: #{slayer_forward.1} parent=0 // pred_check
    _
  $region15: #{slayer_forward.1} parent=0 // pred_check_branch
    %18 = sbr.rel (0) target = $region17
  $region16: #{slayer_forward.1} parent=0 // pred_region
    _
  $region17: #{slayer_forward.1} parent=0 // pred_fallthru
    _
  // Predicated region
  $region18: #{slayer_forward.1} parent=0 // pred_check
    _
  $region19: #{slayer_forward.1} parent=0 // pred_check_branch
    %20 = sbr.rel (0) target = $region21
  $region20: #{slayer_forward.1} parent=0 // pred_region
    _
  $region21: #{slayer_forward.1} parent=0 // pred_fallthru
    _
  // Predicated region
  $region22: #{slayer_forward.1} parent=0 // pred_check
    _
  $region23: #{slayer_forward.1} parent=0 // pred_check_branch
    %22 = sbr.rel (0) target = $region25
  $region24: #{slayer_forward.1} parent=0 // pred_region
    _
  $region25: #{slayer_forward.1} parent=0 // pred_fallthru
    _
  %v23 = vld [vmem:[%s3] sm:$0xff]
  %v24 = vld [vmem:[%s3 + $0x8] sm:$0xff]
  %v25 = vld [vmem:[%s3 + $0x10] sm:$0xff]
  %v26 = vld [vmem:[%s3 + $0x18] sm:$0xff]
  %v27 = vlaneseq
  %v28 = vshrl.u32 %v27, 7
  %v29 = vadd.s32 %v28, 8
  %v30 = vadd.s32 %v28, 16
  %v31 = vadd.s32 %v28, 24
  %vm32 = vcmp.lt.s32.totalorder %v28, 30
  %vm33 = vcmp.lt.s32.totalorder %v29, 30
  %vm34 = vcmp.lt.s32.totalorder %v30, 30
  %vm35 = vcmp.lt.s32.totalorder %v31, 30
  %v36 = vld [vmem:[%s1] sm:$0xff]
  %v37 = vld [vmem:[%s1 + $0x8] sm:$0xff]
  %v38 = vld [vmem:[%s1 + $0x10] sm:$0xff]
  %v39 = vld [vmem:[%s1 + $0x18] sm:$0xff]
  %v40 = vld [vmem:[%s1 + $0x20] sm:$0xff]
  %v41 = vld [vmem:[%s1 + $0x28] sm:$0xff]
  %v42 = vld [vmem:[%s1 + $0x30] sm:$0x1]
  %v43 = vld [vmem:[%s1 + $0x38] sm:$0x1]
  %v44 = vld [vmem:[%s0] sm:$0xff]
  %v45 = vld [vmem:[%s0 + $0x8] sm:$0xff]
  %v46 = vld [vmem:[%s0 + $0x10] sm:$0xff]
  %v47 = vld [vmem:[%s0 + $0x18] sm:$0xff]
  %v48 = vld [vmem:[%s0 + $0x20] sm:$0xff]
  %v49 = vld [vmem:[%s0 + $0x28] sm:$0xff]
  %v50 = vld [vmem:[%s0 + $0x30] sm:$0xff]
  %v51 = vld [vmem:[%s0 + $0x38] sm:$0xff]
  %v52 = vld [vmem:[%s0 + $0x40] sm:$0xff]
  %v53 = vld [vmem:[%s0 + $0x48] sm:$0xff]
  %v54 = vld [vmem:[%s0 + $0x50] sm:$0xff]
  %v55 = vld [vmem:[%s0 + $0x58] sm:$0xff]
  %v56 = vld [vmem:[%s0 + $0x60] sm:$0xff]
  %v57 = vld [vmem:[%s0 + $0x68] sm:$0xff]
  %v58 = vld [vmem:[%s0 + $0x70] sm:$0xff]
  %v59 = vld [vmem:[%s0 + $0x78] sm:$0xff]
  %v60 = vld [vmem:[%s0 + $0x80] sm:$0xff]
  %v61 = vld [vmem:[%s0 + $0x88] sm:$0xff]
  %v62 = vld [vmem:[%s0 + $0x90] sm:$0xff]
  %v63 = vld [vmem:[%s0 + $0x98] sm:$0xff]
  %v64 = vld [vmem:[%s0 + $0xa0] sm:$0xff]
  %v65 = vld [vmem:[%s0 + $0xa8] sm:$0xff]
  %v66 = vld [vmem:[%s0 + $0xb0] sm:$0xff]
  %v67 = vld [vmem:[%s0 + $0xb8] sm:$0xff]
  %v68 = vld [vmem:[%s0 + $0xc0] sm:$0xff]
  %v69 = vld [vmem:[%s0 + $0xc8] sm:$0xff]
  %v70 = vld [vmem:[%s0 + $0xd0] sm:$0xff]
  %v71 = vld [vmem:[%s0 + $0xd8] sm:$0xff]
  %v72 = vld [vmem:[%s0 + $0xe0] sm:$0xff]
  %v73 = vld [vmem:[%s0 + $0xe8] sm:$0xff]
  %v74 = vld [vmem:[%s0 + $0xf0] sm:$0xff]
  %v75 = vld [vmem:[%s0 + $0xf8] sm:$0x3]
  %vm76 = vcmask 998400
  %v78 = vsel %vm76, %v37, 0
  %v81 = vsel %vm76, %v39, 0
  %v84 = vsel %vm76, %v41, 0
  %v87 = vsel %vm76, %v43, 0
  %vm89 = vcmask 1041408
  %v91 = vsel %vm89, %v75, 0
  %93 = vmatprep.subr.mxu0 0.0
  %94 = vmatpush1.msra.mxu0 %v44
  %95 = vmatprep.subr.mxu0 0.0
  %96 = vmatpush1.msra.mxu0 %v45
  %97 = vmatprep.subr.mxu0 0.0
  %98 = vmatpush1.msra.mxu0 %v46
  %99 = vmatprep.subr.mxu0 0.0
  %100 = vmatpush1.msra.mxu0 %v47
  %101 = vmatprep.subr.mxu0 0.0
  %102 = vmatpush1.msra.mxu0 %v48
  %103 = vmatprep.subr.mxu0 0.0
  %104 = vmatpush1.msra.mxu0 %v49
  %105 = vmatprep.subr.mxu0 0.0
  %106 = vmatpush1.msra.mxu0 %v50
  %107 = vmatprep.subr.mxu0 0.0
  %108 = vmatpush1.msra.mxu0 %v51
  %109 = vmatprep.subr.mxu0 0.0
  %110 = vmatpush1.msra.mxu0 %v52
  %111 = vmatprep.subr.mxu0 0.0
  %112 = vmatpush1.msra.mxu0 %v53
  %113 = vmatprep.subr.mxu0 0.0
  %114 = vmatpush1.msra.mxu0 %v54
  %115 = vmatprep.subr.mxu0 0.0
  %116 = vmatpush1.msra.mxu0 %v55
  %117 = vmatprep.subr.mxu0 0.0
  %118 = vmatpush1.msra.mxu0 %v56
  %119 = vmatprep.subr.mxu0 0.0
  %120 = vmatpush1.msra.mxu0 %v57
  %121 = vmatprep.subr.mxu0 0.0
  %122 = vmatpush1.msra.mxu0 %v58
  %123 = vmatprep.subr.mxu0 0.0
  %124 = vmatpush1.msra.mxu0 %v59
  %125 = vmatprep.subr.mxu0 0.0
  %126 = vmatpush1.msra.mxu0 %v60
  %127 = vmatprep.subr.mxu0 0.0
  %128 = vmatpush1.msra.mxu0 %v61
  %129 = vmatprep.subr.mxu0 0.0
  %130 = vmatpush1.msra.mxu0 %v62
  %131 = vmatprep.subr.mxu0 0.0
  %132 = vmatpush1.msra.mxu0 %v63
  %133 = vmatprep.subr.mxu0 0.0
  %134 = vmatpush1.msra.mxu0 %v64
  %135 = vmatprep.subr.mxu0 0.0
  %136 = vmatpush1.msra.mxu0 %v65
  %137 = vmatprep.subr.mxu0 0.0
  %138 = vmatpush1.msra.mxu0 %v66
  %139 = vmatprep.subr.mxu0 0.0
  %140 = vmatpush1.msra.mxu0 %v67
  %141 = vmatprep.subr.mxu0 0.0
  %142 = vmatpush1.msra.mxu0 %v68
  %143 = vmatprep.subr.mxu0 0.0
  %144 = vmatpush1.msra.mxu0 %v69
  %145 = vmatprep.subr.mxu0 0.0
  %146 = vmatpush1.msra.mxu0 %v70
  %147 = vmatprep.subr.mxu0 0.0
  %148 = vmatpush1.msra.mxu0 %v71
  %149 = vmatprep.subr.mxu0 0.0
  %150 = vmatpush1.msra.mxu0 %v72
  %151 = vmatprep.subr.mxu0 0.0
  %152 = vmatpush1.msra.mxu0 %v73
  %153 = vmatprep.subr.mxu0 0.0
  %154 = vmatpush1.msra.mxu0 %v74
  %155 = vmatprep.subr.mxu0 0.0
  %156 = vmatpush1.msra.mxu0 %v91
  %157 = vmatprep.mubr.f32.mxu0 %v78
  %158 = vmatmul.mubr.f32.gmra.mrb[0].mxu0 %v36
  %v159 = vpop.f32.mrb[0].mxu0
  %v160 = vadd.f32 0.0, %v159
  %v161 = vpop.f32.mrb[0].mxu0
  %162 = vmatprep.mubr.f32.mxu0 %v81
  %163 = vmatmul.mubr.f32.gmra.mrb[0].mxu0 %v38
  %v164 = vpop.f32.mrb[0].mxu0
  %v165 = vadd.f32 0.0, %v164
  %v166 = vpop.f32.mrb[0].mxu0
  %167 = vmatprep.mubr.f32.mxu0 %v84
  %168 = vmatmul.mubr.f32.gmra.mrb[0].mxu0 %v40
  %v169 = vpop.f32.mrb[0].mxu0
  %v170 = vadd.f32 0.0, %v169
  %v171 = vpop.f32.mrb[0].mxu0
  %172 = vmatprep.mubr.f32.mxu0 %v87
  %173 = vmatmul.mubr.f32.gmra.mrb[0].mxu0 %v42
  %v174 = vpop.f32.mrb[0].mxu0
  %v175 = vadd.f32 0.0, %v174
  %v176 = vpop.f32.mrb[0].mxu0
  %177 = vdwg.mxu0
  %vm178 = vcmask 261120
  %v180 = vsel %vm178, %v23, 0
  %v183 = vsel %vm178, %v24, 0
  %v186 = vsel %vm178, %v25, 0
  %v189 = vsel %vm178, %v26, 0
  %v192 = vsel %vm178, %v160, 0
  %v195 = vsel %vm178, %v165, 0
  %v198 = vsel %vm178, %v170, 0
  %v201 = vsel %vm178, %v175, 0
  %203 = vmatprep.subr.mxu0 0.0
  %204 = vmatpush1.xpose.msra.mxu0 %v192
  %205 = vmatprep.subr.mxu0 0.0
  %206 = vmatpush1.xpose.msra.mxu0 %v195
  %207 = vmatprep.subr.mxu0 0.0
  %208 = vmatpush1.xpose.msra.mxu0 %v198
  %209 = vmatprep.subr.mxu0 0.0
  %210 = vmatpush1.xpose.msra.mxu0 %v201
  %211 = vmatprep.subr.mxu0 0.0
  %212 = vmatpush1.xpose.msra.mxu0 0.0
  %213 = vmatprep.subr.mxu0 0.0
  %214 = vmatpush1.xpose.msra.mxu0 0.0
  %215 = vmatprep.subr.mxu0 0.0
  %216 = vmatpush1.xpose.msra.mxu0 0.0
  %217 = vmatprep.subr.mxu0 0.0
  %218 = vmatpush1.xpose.msra.mxu0 0.0
  %219 = vmatprep.subr.mxu0 0.0
  %220 = vmatpush1.xpose.msra.mxu0 0.0
  %221 = vmatprep.subr.mxu0 0.0
  %222 = vmatpush1.xpose.msra.mxu0 0.0
  %223 = vmatprep.subr.mxu0 0.0
  %224 = vmatpush1.xpose.msra.mxu0 0.0
  %225 = vmatprep.subr.mxu0 0.0
  %226 = vmatpush1.xpose.msra.mxu0 0.0
  %227 = vmatprep.subr.mxu0 0.0
  %228 = vmatpush1.xpose.msra.mxu0 0.0
  %229 = vmatprep.subr.mxu0 0.0
  %230 = vmatpush1.xpose.msra.mxu0 0.0
  %231 = vmatprep.subr.mxu0 0.0
  %232 = vmatpush1.xpose.msra.mxu0 0.0
  %233 = vmatprep.subr.mxu0 0.0
  %234 = vmatpush1.xpose.msra.mxu0 0.0
  %235 = vmatprep.subr.mxu0 0.0
  %236 = vmatpush1.xpose.msra.mxu0 0.0
  %237 = vmatprep.subr.mxu0 0.0
  %238 = vmatpush1.xpose.msra.mxu0 0.0
  %239 = vmatprep.subr.mxu0 0.0
  %240 = vmatpush1.xpose.msra.mxu0 0.0
  %241 = vmatprep.subr.mxu0 0.0
  %242 = vmatpush1.xpose.msra.mxu0 0.0
  %243 = vmatprep.subr.mxu0 0.0
  %244 = vmatpush1.xpose.msra.mxu0 0.0
  %245 = vmatprep.subr.mxu0 0.0
  %246 = vmatpush1.xpose.msra.mxu0 0.0
  %247 = vmatprep.subr.mxu0 0.0
  %248 = vmatpush1.xpose.msra.mxu0 0.0
  %249 = vmatprep.subr.mxu0 0.0
  %250 = vmatpush1.xpose.msra.mxu0 0.0
  %251 = vmatprep.subr.mxu0 0.0
  %252 = vmatpush1.xpose.msra.mxu0 0.0
  %253 = vmatprep.subr.mxu0 0.0
  %254 = vmatpush1.xpose.msra.mxu0 0.0
  %255 = vmatprep.subr.mxu0 0.0
  %256 = vmatpush1.xpose.msra.mxu0 0.0
  %257 = vmatprep.subr.mxu0 0.0
  %258 = vmatpush1.xpose.msra.mxu0 0.0
  %259 = vmatprep.subr.mxu0 0.0
  %260 = vmatpush1.xpose.msra.mxu0 0.0
  %261 = vmatprep.subr.mxu0 0.0
  %262 = vmatpush1.xpose.msra.mxu0 0.0
  %263 = vmatprep.subr.mxu0 0.0
  %264 = vmatpush1.xpose.msra.mxu0 0.0
  %265 = vmatprep.subr.mxu0 0.0
  %266 = vmatpush1.xpose.msra.mxu0 0.0
  %267 = vmatprep.mubr.f32.mxu0 0.0
  %268 = vmatmul.mubr.f32.gmra.mrb[0].mxu0 %v180
  %v269 = vpop.f32.mrb[0].mxu0
  %v270 = vadd.f32 0.0, %v269
  %v271 = vpop.f32.mrb[0].mxu0
  %272 = vmatprep.mubr.f32.mxu0 0.0
  %273 = vmatmul.mubr.f32.gmra.mrb[0].mxu0 %v183
  %v274 = vpop.f32.mrb[0].mxu0
  %v275 = vadd.f32 0.0, %v274
  %v276 = vpop.f32.mrb[0].mxu0
  %277 = vmatprep.mubr.f32.mxu0 0.0
  %278 = vmatmul.mubr.f32.gmra.mrb[0].mxu0 %v186
  %v279 = vpop.f32.mrb[0].mxu0
  %v280 = vadd.f32 0.0, %v279
  %v281 = vpop.f32.mrb[0].mxu0
  %282 = vmatprep.mubr.f32.mxu0 0.0
  %283 = vmatmul.mubr.f32.gmra.mrb[0].mxu0 %v189
  %v284 = vpop.f32.mrb[0].mxu0
  %v285 = vadd.f32 0.0, %v284
  %v286 = vpop.f32.mrb[0].mxu0
  %287 = vdwg.mxu0
  %vm288 = vcmp.gt.f32.partialorder %v270, 1.0
  %v289 = vsel %vm288, 1, 0
  %v290 = vcvt.s32.f32 %v289
  %v291 = vld [vmem:[%s4] sm:$0xff]
  %v292 = vld [vmem:[%s4 + $0x8] sm:$0xff]
  %v293 = vld [vmem:[%s4 + $0x10] sm:$0xff]
  %v294 = vld [vmem:[%s4 + $0x18] sm:$0xff]
  %v295 = vlaneseq
  %v296 = vshrl.u32 %v295, 7
  %v297 = vsub.s32 0, %v296
  %v298 = vrot.slane %v290, %v297
  %v299 = vmul.f32 %v298, %v291
  %v300 = vmul.f32 %v298, %v292
  %v301 = vmul.f32 %v298, %v293
  %v302 = vmul.f32 %v298, %v294
  %v303 = vadd.f32 %v270, %v299
  %v304 = vadd.f32 %v275, %v300
  %v305 = vadd.f32 %v280, %v301
  %v306 = vadd.f32 %v285, %v302
  %vm307 = vcmp.gt.f32.partialorder %v303, 1.0
  %v308 = vsel %vm307, 1, 0
  %v309 = vcvt.s32.f32 %v308
  %s310 = scalar_lea.vmem %s4, 32
  %v311 = vld [vmem:[%s310] sm:$0xff]
  %v312 = vld [vmem:[%s310 + $0x8] sm:$0xff]
  %v313 = vld [vmem:[%s310 + $0x10] sm:$0xff]
  %v314 = vld [vmem:[%s310 + $0x18] sm:$0xff]
  %v315 = vlaneseq
  %v316 = vshrl.u32 %v315, 7
  %v317 = vsub.s32 1, %v316
  %v318 = vrot.slane %v309, %v317
  %v319 = vmul.f32 %v318, %v311
  %v320 = vmul.f32 %v318, %v312
  %v321 = vmul.f32 %v318, %v313
  %v322 = vmul.f32 %v318, %v314
  %v323 = vadd.f32 %v303, %v319
  %v324 = vadd.f32 %v304, %v320
  %v325 = vadd.f32 %v305, %v321
  %v326 = vadd.f32 %v306, %v322
  %vm327 = vcmp.gt.f32.partialorder %v323, 1.0
  %v328 = vsel %vm327, 1, 0
  %v329 = vcvt.s32.f32 %v328
  %s330 = scalar_lea.vmem %s4, 64
  %v331 = vld [vmem:[%s330] sm:$0xff]
  %v332 = vld [vmem:[%s330 + $0x8] sm:$0xff]
  %v333 = vld [vmem:[%s330 + $0x10] sm:$0xff]
  %v334 = vld [vmem:[%s330 + $0x18] sm:$0xff]
  %v335 = vlaneseq
  %v336 = vshrl.u32 %v335, 7
  %v337 = vsub.s32 2, %v336
  %v338 = vrot.slane %v329, %v337
  %v339 = vmul.f32 %v338, %v331
  %v340 = vmul.f32 %v338, %v332
  %v341 = vmul.f32 %v338, %v333
  %v342 = vmul.f32 %v338, %v334
  %v343 = vadd.f32 %v323, %v339
  %v344 = vadd.f32 %v324, %v340
  %v345 = vadd.f32 %v325, %v341
  %v346 = vadd.f32 %v326, %v342
  %vm347 = vcmp.gt.f32.partialorder %v343, 1.0
  %v348 = vsel %vm347, 1, 0
  %v349 = vcvt.s32.f32 %v348
  %s350 = scalar_lea.vmem %s4, 96
  %v351 = vld [vmem:[%s350] sm:$0xff]
  %v352 = vld [vmem:[%s350 + $0x8] sm:$0xff]
  %v353 = vld [vmem:[%s350 + $0x10] sm:$0xff]
  %v354 = vld [vmem:[%s350 + $0x18] sm:$0xff]
  %v355 = vlaneseq
  %v356 = vshrl.u32 %v355, 7
  %v357 = vsub.s32 3, %v356
  %v358 = vrot.slane %v349, %v357
  %v359 = vmul.f32 %v358, %v351
  %v360 = vmul.f32 %v358, %v352
  %v361 = vmul.f32 %v358, %v353
  %v362 = vmul.f32 %v358, %v354
  %v363 = vadd.f32 %v343, %v359
  %v364 = vadd.f32 %v344, %v360
  %v365 = vadd.f32 %v345, %v361
  %v366 = vadd.f32 %v346, %v362
  %vm367 = vcmp.gt.f32.partialorder %v363, 1.0
  %v368 = vsel %vm367, 1, 0
  %v369 = vcvt.s32.f32 %v368
  %s370 = scalar_lea.vmem %s4, 128
  %v371 = vld [vmem:[%s370] sm:$0xff]
  %v372 = vld [vmem:[%s370 + $0x8] sm:$0xff]
  %v373 = vld [vmem:[%s370 + $0x10] sm:$0xff]
  %v374 = vld [vmem:[%s370 + $0x18] sm:$0xff]
  %v375 = vlaneseq
  %v376 = vshrl.u32 %v375, 7
  %v377 = vsub.s32 4, %v376
  %v378 = vrot.slane %v369, %v377
  %v379 = vmul.f32 %v378, %v371
  %v380 = vmul.f32 %v378, %v372
  %v381 = vmul.f32 %v378, %v373
  %v382 = vmul.f32 %v378, %v374
  %v383 = vadd.f32 %v363, %v379
  %v384 = vadd.f32 %v364, %v380
  %v385 = vadd.f32 %v365, %v381
  %v386 = vadd.f32 %v366, %v382
  %vm387 = vcmp.gt.f32.partialorder %v383, 1.0
  %v388 = vsel %vm387, 1, 0
  %v389 = vcvt.s32.f32 %v388
  %s390 = scalar_lea.vmem %s4, 160
  %v391 = vld [vmem:[%s390] sm:$0xff]
  %v392 = vld [vmem:[%s390 + $0x8] sm:$0xff]
  %v393 = vld [vmem:[%s390 + $0x10] sm:$0xff]
  %v394 = vld [vmem:[%s390 + $0x18] sm:$0xff]
  %v395 = vlaneseq
  %v396 = vshrl.u32 %v395, 7
  %v397 = vsub.s32 5, %v396
  %v398 = vrot.slane %v389, %v397
  %v399 = vmul.f32 %v398, %v391
  %v400 = vmul.f32 %v398, %v392
  %v401 = vmul.f32 %v398, %v393
  %v402 = vmul.f32 %v398, %v394
  %v403 = vadd.f32 %v383, %v399
  %v404 = vadd.f32 %v384, %v400
  %v405 = vadd.f32 %v385, %v401
  %v406 = vadd.f32 %v386, %v402
  %vm407 = vcmp.gt.f32.partialorder %v403, 1.0
  %v408 = vsel %vm407, 1, 0
  %v409 = vcvt.s32.f32 %v408
  %s410 = scalar_lea.vmem %s4, 192
  %v411 = vld [vmem:[%s410] sm:$0xff]
  %v412 = vld [vmem:[%s410 + $0x8] sm:$0xff]
  %v413 = vld [vmem:[%s410 + $0x10] sm:$0xff]
  %v414 = vld [vmem:[%s410 + $0x18] sm:$0xff]
  %v415 = vlaneseq
  %v416 = vshrl.u32 %v415, 7
  %v417 = vsub.s32 6, %v416
  %v418 = vrot.slane %v409, %v417
  %v419 = vmul.f32 %v418, %v411
  %v420 = vmul.f32 %v418, %v412
  %v421 = vmul.f32 %v418, %v413
  %v422 = vmul.f32 %v418, %v414
  %v423 = vadd.f32 %v403, %v419
  %v424 = vadd.f32 %v404, %v420
  %v425 = vadd.f32 %v405, %v421
  %v426 = vadd.f32 %v406, %v422
  %vm427 = vcmp.gt.f32.partialorder %v423, 1.0
  %v428 = vsel %vm427, 1, 0
  %v429 = vcvt.s32.f32 %v428
  %s430 = scalar_lea.vmem %s4, 224
  %v431 = vld [vmem:[%s430] sm:$0xff]
  %v432 = vld [vmem:[%s430 + $0x8] sm:$0xff]
  %v433 = vld [vmem:[%s430 + $0x10] sm:$0xff]
  %v434 = vld [vmem:[%s430 + $0x18] sm:$0xff]
  %v435 = vlaneseq
  %v436 = vshrl.u32 %v435, 7
  %v437 = vsub.s32 7, %v436
  %v438 = vrot.slane %v429, %v437
  %v439 = vmul.f32 %v438, %v431
  %v440 = vmul.f32 %v438, %v432
  %v441 = vmul.f32 %v438, %v433
  %v442 = vmul.f32 %v438, %v434
  %v443 = vadd.f32 %v423, %v439
  %v444 = vadd.f32 %v424, %v440
  %v445 = vadd.f32 %v425, %v441
  %v446 = vadd.f32 %v426, %v442
  %vm447 = vcmp.gt.f32.partialorder %v444, 1.0
  %v448 = vsel %vm447, 1, 0
  %v449 = vcvt.s32.f32 %v448
  %s450 = scalar_lea.vmem %s4, 256
  %v451 = vld [vmem:[%s450] sm:$0xff]
  %v452 = vld [vmem:[%s450 + $0x8] sm:$0xff]
  %v453 = vld [vmem:[%s450 + $0x10] sm:$0xff]
  %v454 = vld [vmem:[%s450 + $0x18] sm:$0xff]
  %v455 = vlaneseq
  %v456 = vshrl.u32 %v455, 7
  %v457 = vsub.s32 0, %v456
  %v458 = vrot.slane %v449, %v457
  %v459 = vmul.f32 %v458, %v451
  %v460 = vmul.f32 %v458, %v452
  %v461 = vmul.f32 %v458, %v453
  %v462 = vmul.f32 %v458, %v454
  %v463 = vadd.f32 %v443, %v459
  %v464 = vadd.f32 %v444, %v460
  %v465 = vadd.f32 %v445, %v461
  %v466 = vadd.f32 %v446, %v462
  %vm467 = vcmp.gt.f32.partialorder %v464, 1.0
  %v468 = vsel %vm467, 1, 0
  %v469 = vcvt.s32.f32 %v468
  %s470 = scalar_lea.vmem %s4, 288
  %v471 = vld [vmem:[%s470] sm:$0xff]
  %v472 = vld [vmem:[%s470 + $0x8] sm:$0xff]
  %v473 = vld [vmem:[%s470 + $0x10] sm:$0xff]
  %v474 = vld [vmem:[%s470 + $0x18] sm:$0xff]
  %v475 = vlaneseq
  %v476 = vshrl.u32 %v475, 7
  %v477 = vsub.s32 1, %v476
  %v478 = vrot.slane %v469, %v477
  %v479 = vmul.f32 %v478, %v471
  %v480 = vmul.f32 %v478, %v472
  %v481 = vmul.f32 %v478, %v473
  %v482 = vmul.f32 %v478, %v474
  %v483 = vadd.f32 %v463, %v479
  %v484 = vadd.f32 %v464, %v480
  %v485 = vadd.f32 %v465, %v481
  %v486 = vadd.f32 %v466, %v482
  %vm487 = vcmp.gt.f32.partialorder %v484, 1.0
  %v488 = vsel %vm487, 1, 0
  %v489 = vcvt.s32.f32 %v488
  %s490 = scalar_lea.vmem %s4, 320
  %v491 = vld [vmem:[%s490] sm:$0xff]
  %v492 = vld [vmem:[%s490 + $0x8] sm:$0xff]
  %v493 = vld [vmem:[%s490 + $0x10] sm:$0xff]
  %v494 = vld [vmem:[%s490 + $0x18] sm:$0xff]
  %v495 = vlaneseq
  %v496 = vshrl.u32 %v495, 7
  %v497 = vsub.s32 2, %v496
  %v498 = vrot.slane %v489, %v497
  %v499 = vmul.f32 %v498, %v491
  %v500 = vmul.f32 %v498, %v492
  %v501 = vmul.f32 %v498, %v493
  %v502 = vmul.f32 %v498, %v494
  %v503 = vadd.f32 %v483, %v499
  %v504 = vadd.f32 %v484, %v500
  %v505 = vadd.f32 %v485, %v501
  %v506 = vadd.f32 %v486, %v502
  %vm507 = vcmp.gt.f32.partialorder %v504, 1.0
  %v508 = vsel %vm507, 1, 0
  %v509 = vcvt.s32.f32 %v508
  %s510 = scalar_lea.vmem %s4, 352
  %v511 = vld [vmem:[%s510] sm:$0xff]
  %v512 = vld [vmem:[%s510 + $0x8] sm:$0xff]
  %v513 = vld [vmem:[%s510 + $0x10] sm:$0xff]
  %v514 = vld [vmem:[%s510 + $0x18] sm:$0xff]
  %v515 = vlaneseq
  %v516 = vshrl.u32 %v515, 7
  %v517 = vsub.s32 3, %v516
  %v518 = vrot.slane %v509, %v517
  %v519 = vmul.f32 %v518, %v511
  %v520 = vmul.f32 %v518, %v512
  %v521 = vmul.f32 %v518, %v513
  %v522 = vmul.f32 %v518, %v514
  %v523 = vadd.f32 %v503, %v519
  %v524 = vadd.f32 %v504, %v520
  %v525 = vadd.f32 %v505, %v521
  %v526 = vadd.f32 %v506, %v522
  %vm527 = vcmp.gt.f32.partialorder %v524, 1.0
  %v528 = vsel %vm527, 1, 0
  %v529 = vcvt.s32.f32 %v528
  %s530 = scalar_lea.vmem %s4, 384
  %v531 = vld [vmem:[%s530] sm:$0xff]
  %v532 = vld [vmem:[%s530 + $0x8] sm:$0xff]
  %v533 = vld [vmem:[%s530 + $0x10] sm:$0xff]
  %v534 = vld [vmem:[%s530 + $0x18] sm:$0xff]
  %v535 = vlaneseq
  %v536 = vshrl.u32 %v535, 7
  %v537 = vsub.s32 4, %v536
  %v538 = vrot.slane %v529, %v537
  %v539 = vmul.f32 %v538, %v531
  %v540 = vmul.f32 %v538, %v532
  %v541 = vmul.f32 %v538, %v533
  %v542 = vmul.f32 %v538, %v534
  %v543 = vadd.f32 %v523, %v539
  %v544 = vadd.f32 %v524, %v540
  %v545 = vadd.f32 %v525, %v541
  %v546 = vadd.f32 %v526, %v542
  %vm547 = vcmp.gt.f32.partialorder %v544, 1.0
  %v548 = vsel %vm547, 1, 0
  %v549 = vcvt.s32.f32 %v548
  %s550 = scalar_lea.vmem %s4, 416
  %v551 = vld [vmem:[%s550] sm:$0xff]
  %v552 = vld [vmem:[%s550 + $0x8] sm:$0xff]
  %v553 = vld [vmem:[%s550 + $0x10] sm:$0xff]
  %v554 = vld [vmem:[%s550 + $0x18] sm:$0xff]
  %v555 = vlaneseq
  %v556 = vshrl.u32 %v555, 7
  %v557 = vsub.s32 5, %v556
  %v558 = vrot.slane %v549, %v557
  %v559 = vmul.f32 %v558, %v551
  %v560 = vmul.f32 %v558, %v552
  %v561 = vmul.f32 %v558, %v553
  %v562 = vmul.f32 %v558, %v554
  %v563 = vadd.f32 %v543, %v559
  %v564 = vadd.f32 %v544, %v560
  %v565 = vadd.f32 %v545, %v561
  %v566 = vadd.f32 %v546, %v562
  %vm567 = vcmp.gt.f32.partialorder %v564, 1.0
  %v568 = vsel %vm567, 1, 0
  %v569 = vcvt.s32.f32 %v568
  %s570 = scalar_lea.vmem %s4, 448
  %v571 = vld [vmem:[%s570] sm:$0xff]
  %v572 = vld [vmem:[%s570 + $0x8] sm:$0xff]
  %v573 = vld [vmem:[%s570 + $0x10] sm:$0xff]
  %v574 = vld [vmem:[%s570 + $0x18] sm:$0xff]
  %v575 = vlaneseq
  %v576 = vshrl.u32 %v575, 7
  %v577 = vsub.s32 6, %v576
  %v578 = vrot.slane %v569, %v577
  %v579 = vmul.f32 %v578, %v571
  %v580 = vmul.f32 %v578, %v572
  %v581 = vmul.f32 %v578, %v573
  %v582 = vmul.f32 %v578, %v574
  %v583 = vadd.f32 %v563, %v579
  %v584 = vadd.f32 %v564, %v580
  %v585 = vadd.f32 %v565, %v581
  %v586 = vadd.f32 %v566, %v582
  %vm587 = vcmp.gt.f32.partialorder %v584, 1.0
  %v588 = vsel %vm587, 1, 0
  %v589 = vcvt.s32.f32 %v588
  %s590 = scalar_lea.vmem %s4, 480
  %v591 = vld [vmem:[%s590] sm:$0xff]
  %v592 = vld [vmem:[%s590 + $0x8] sm:$0xff]
  %v593 = vld [vmem:[%s590 + $0x10] sm:$0xff]
  %v594 = vld [vmem:[%s590 + $0x18] sm:$0xff]
  %v595 = vlaneseq
  %v596 = vshrl.u32 %v595, 7
  %v597 = vsub.s32 7, %v596
  %v598 = vrot.slane %v589, %v597
  %v599 = vmul.f32 %v598, %v591
  %v600 = vmul.f32 %v598, %v592
  %v601 = vmul.f32 %v598, %v593
  %v602 = vmul.f32 %v598, %v594
  %v603 = vadd.f32 %v583, %v599
  %v604 = vadd.f32 %v584, %v600
  %v605 = vadd.f32 %v585, %v601
  %v606 = vadd.f32 %v586, %v602
  %vm607 = vcmp.gt.f32.partialorder %v605, 1.0
  %v608 = vsel %vm607, 1, 0
  %v609 = vcvt.s32.f32 %v608
  %s610 = scalar_lea.vmem %s4, 512
  %v611 = vld [vmem:[%s610] sm:$0xff]
  %v612 = vld [vmem:[%s610 + $0x8] sm:$0xff]
  %v613 = vld [vmem:[%s610 + $0x10] sm:$0xff]
  %v614 = vld [vmem:[%s610 + $0x18] sm:$0xff]
  %v615 = vlaneseq
  %v616 = vshrl.u32 %v615, 7
  %v617 = vsub.s32 0, %v616
  %v618 = vrot.slane %v609, %v617
  %v619 = vmul.f32 %v618, %v611
  %v620 = vmul.f32 %v618, %v612
  %v621 = vmul.f32 %v618, %v613
  %v622 = vmul.f32 %v618, %v614
  %v623 = vadd.f32 %v603, %v619
  %v624 = vadd.f32 %v604, %v620
  %v625 = vadd.f32 %v605, %v621
  %v626 = vadd.f32 %v606, %v622
  %vm627 = vcmp.gt.f32.partialorder %v625, 1.0
  %v628 = vsel %vm627, 1, 0
  %v629 = vcvt.s32.f32 %v628
  %s630 = scalar_lea.vmem %s4, 544
  %v631 = vld [vmem:[%s630] sm:$0xff]
  %v632 = vld [vmem:[%s630 + $0x8] sm:$0xff]
  %v633 = vld [vmem:[%s630 + $0x10] sm:$0xff]
  %v634 = vld [vmem:[%s630 + $0x18] sm:$0xff]
  %v635 = vlaneseq
  %v636 = vshrl.u32 %v635, 7
  %v637 = vsub.s32 1, %v636
  %v638 = vrot.slane %v629, %v637
  %v639 = vmul.f32 %v638, %v631
  %v640 = vmul.f32 %v638, %v632
  %v641 = vmul.f32 %v638, %v633
  %v642 = vmul.f32 %v638, %v634
  %v643 = vadd.f32 %v623, %v639
  %v644 = vadd.f32 %v624, %v640
  %v645 = vadd.f32 %v625, %v641
  %v646 = vadd.f32 %v626, %v642
  %vm647 = vcmp.gt.f32.partialorder %v645, 1.0
  %v648 = vsel %vm647, 1, 0
  %v649 = vcvt.s32.f32 %v648
  %s650 = scalar_lea.vmem %s4, 576
  %v651 = vld [vmem:[%s650] sm:$0xff]
  %v652 = vld [vmem:[%s650 + $0x8] sm:$0xff]
  %v653 = vld [vmem:[%s650 + $0x10] sm:$0xff]
  %v654 = vld [vmem:[%s650 + $0x18] sm:$0xff]
  %v655 = vlaneseq
  %v656 = vshrl.u32 %v655, 7
  %v657 = vsub.s32 2, %v656
  %v658 = vrot.slane %v649, %v657
  %v659 = vmul.f32 %v658, %v651
  %v660 = vmul.f32 %v658, %v652
  %v661 = vmul.f32 %v658, %v653
  %v662 = vmul.f32 %v658, %v654
  %v663 = vadd.f32 %v643, %v659
  %v664 = vadd.f32 %v644, %v660
  %v665 = vadd.f32 %v645, %v661
  %v666 = vadd.f32 %v646, %v662
  %vm667 = vcmp.gt.f32.partialorder %v665, 1.0
  %v668 = vsel %vm667, 1, 0
  %v669 = vcvt.s32.f32 %v668
  %s670 = scalar_lea.vmem %s4, 608
  %v671 = vld [vmem:[%s670] sm:$0xff]
  %v672 = vld [vmem:[%s670 + $0x8] sm:$0xff]
  %v673 = vld [vmem:[%s670 + $0x10] sm:$0xff]
  %v674 = vld [vmem:[%s670 + $0x18] sm:$0xff]
  %v675 = vlaneseq
  %v676 = vshrl.u32 %v675, 7
  %v677 = vsub.s32 3, %v676
  %v678 = vrot.slane %v669, %v677
  %v679 = vmul.f32 %v678, %v671
  %v680 = vmul.f32 %v678, %v672
  %v681 = vmul.f32 %v678, %v673
  %v682 = vmul.f32 %v678, %v674
  %v683 = vadd.f32 %v663, %v679
  %v684 = vadd.f32 %v664, %v680
  %v685 = vadd.f32 %v665, %v681
  %v686 = vadd.f32 %v666, %v682
  %vm687 = vcmp.gt.f32.partialorder %v685, 1.0
  %v688 = vsel %vm687, 1, 0
  %v689 = vcvt.s32.f32 %v688
  %s690 = scalar_lea.vmem %s4, 640
  %v691 = vld [vmem:[%s690] sm:$0xff]
  %v692 = vld [vmem:[%s690 + $0x8] sm:$0xff]
  %v693 = vld [vmem:[%s690 + $0x10] sm:$0xff]
  %v694 = vld [vmem:[%s690 + $0x18] sm:$0xff]
  %v695 = vlaneseq
  %v696 = vshrl.u32 %v695, 7
  %v697 = vsub.s32 4, %v696
  %v698 = vrot.slane %v689, %v697
  %v699 = vmul.f32 %v698, %v691
  %v700 = vmul.f32 %v698, %v692
  %v701 = vmul.f32 %v698, %v693
  %v702 = vmul.f32 %v698, %v694
  %v703 = vadd.f32 %v683, %v699
  %v704 = vadd.f32 %v684, %v700
  %v705 = vadd.f32 %v685, %v701
  %v706 = vadd.f32 %v686, %v702
  %vm707 = vcmp.gt.f32.partialorder %v705, 1.0
  %v708 = vsel %vm707, 1, 0
  %v709 = vcvt.s32.f32 %v708
  %s710 = scalar_lea.vmem %s4, 672
  %v711 = vld [vmem:[%s710] sm:$0xff]
  %v712 = vld [vmem:[%s710 + $0x8] sm:$0xff]
  %v713 = vld [vmem:[%s710 + $0x10] sm:$0xff]
  %v714 = vld [vmem:[%s710 + $0x18] sm:$0xff]
  %v715 = vlaneseq
  %v716 = vshrl.u32 %v715, 7
  %v717 = vsub.s32 5, %v716
  %v718 = vrot.slane %v709, %v717
  %v719 = vmul.f32 %v718, %v711
  %v720 = vmul.f32 %v718, %v712
  %v721 = vmul.f32 %v718, %v713
  %v722 = vmul.f32 %v718, %v714
  %v723 = vadd.f32 %v703, %v719
  %v724 = vadd.f32 %v704, %v720
  %v725 = vadd.f32 %v705, %v721
  %v726 = vadd.f32 %v706, %v722
  %vm727 = vcmp.gt.f32.partialorder %v725, 1.0
  %v728 = vsel %vm727, 1, 0
  %v729 = vcvt.s32.f32 %v728
  %s730 = scalar_lea.vmem %s4, 704
  %v731 = vld [vmem:[%s730] sm:$0xff]
  %v732 = vld [vmem:[%s730 + $0x8] sm:$0xff]
  %v733 = vld [vmem:[%s730 + $0x10] sm:$0xff]
  %v734 = vld [vmem:[%s730 + $0x18] sm:$0xff]
  %v735 = vlaneseq
  %v736 = vshrl.u32 %v735, 7
  %v737 = vsub.s32 6, %v736
  %v738 = vrot.slane %v729, %v737
  %v739 = vmul.f32 %v738, %v731
  %v740 = vmul.f32 %v738, %v732
  %v741 = vmul.f32 %v738, %v733
  %v742 = vmul.f32 %v738, %v734
  %v743 = vadd.f32 %v723, %v739
  %v744 = vadd.f32 %v724, %v740
  %v745 = vadd.f32 %v725, %v741
  %v746 = vadd.f32 %v726, %v742
  %vm747 = vcmp.gt.f32.partialorder %v745, 1.0
  %v748 = vsel %vm747, 1, 0
  %v749 = vcvt.s32.f32 %v748
  %s750 = scalar_lea.vmem %s4, 736
  %v751 = vld [vmem:[%s750] sm:$0xff]
  %v752 = vld [vmem:[%s750 + $0x8] sm:$0xff]
  %v753 = vld [vmem:[%s750 + $0x10] sm:$0xff]
  %v754 = vld [vmem:[%s750 + $0x18] sm:$0xff]
  %v755 = vlaneseq
  %v756 = vshrl.u32 %v755, 7
  %v757 = vsub.s32 7, %v756
  %v758 = vrot.slane %v749, %v757
  %v759 = vmul.f32 %v758, %v751
  %v760 = vmul.f32 %v758, %v752
  %v761 = vmul.f32 %v758, %v753
  %v762 = vmul.f32 %v758, %v754
  %v763 = vadd.f32 %v743, %v759
  %v764 = vadd.f32 %v744, %v760
  %v765 = vadd.f32 %v745, %v761
  %v766 = vadd.f32 %v746, %v762
  %vm767 = vcmp.gt.f32.partialorder %v766, 1.0
  %v768 = vsel %vm767, 1, 0
  %v769 = vcvt.s32.f32 %v768
  %s770 = scalar_lea.vmem %s4, 768
  %v771 = vld [vmem:[%s770] sm:$0xff]
  %v772 = vld [vmem:[%s770 + $0x8] sm:$0xff]
  %v773 = vld [vmem:[%s770 + $0x10] sm:$0xff]
  %v774 = vld [vmem:[%s770 + $0x18] sm:$0xff]
  %v775 = vlaneseq
  %v776 = vshrl.u32 %v775, 7
  %v777 = vsub.s32 0, %v776
  %v778 = vrot.slane %v769, %v777
  %v779 = vmul.f32 %v778, %v771
  %v780 = vmul.f32 %v778, %v772
  %v781 = vmul.f32 %v778, %v773
  %v782 = vmul.f32 %v778, %v774
  %v783 = vadd.f32 %v763, %v779
  %v784 = vadd.f32 %v764, %v780
  %v785 = vadd.f32 %v765, %v781
  %v786 = vadd.f32 %v766, %v782
  %vm787 = vcmp.gt.f32.partialorder %v786, 1.0
  %v788 = vsel %vm787, 1, 0
  %v789 = vcvt.s32.f32 %v788
  %s790 = scalar_lea.vmem %s4, 800
  %v791 = vld [vmem:[%s790] sm:$0xff]
  %v792 = vld [vmem:[%s790 + $0x8] sm:$0xff]
  %v793 = vld [vmem:[%s790 + $0x10] sm:$0xff]
  %v794 = vld [vmem:[%s790 + $0x18] sm:$0xff]
  %v795 = vlaneseq
  %v796 = vshrl.u32 %v795, 7
  %v797 = vsub.s32 1, %v796
  %v798 = vrot.slane %v789, %v797
  %v799 = vmul.f32 %v798, %v791
  %v800 = vmul.f32 %v798, %v792
  %v801 = vmul.f32 %v798, %v793
  %v802 = vmul.f32 %v798, %v794
  %v803 = vadd.f32 %v783, %v799
  %v804 = vadd.f32 %v784, %v800
  %v805 = vadd.f32 %v785, %v801
  %v806 = vadd.f32 %v786, %v802
  %vm807 = vcmp.gt.f32.partialorder %v806, 1.0
  %v808 = vsel %vm807, 1, 0
  %v809 = vcvt.s32.f32 %v808
  %s810 = scalar_lea.vmem %s4, 832
  %v811 = vld [vmem:[%s810] sm:$0xff]
  %v812 = vld [vmem:[%s810 + $0x8] sm:$0xff]
  %v813 = vld [vmem:[%s810 + $0x10] sm:$0xff]
  %v814 = vld [vmem:[%s810 + $0x18] sm:$0xff]
  %v815 = vlaneseq
  %v816 = vshrl.u32 %v815, 7
  %v817 = vsub.s32 2, %v816
  %v818 = vrot.slane %v809, %v817
  %v819 = vmul.f32 %v818, %v811
  %v820 = vmul.f32 %v818, %v812
  %v821 = vmul.f32 %v818, %v813
  %v822 = vmul.f32 %v818, %v814
  %v823 = vadd.f32 %v803, %v819
  %v824 = vadd.f32 %v804, %v820
  %v825 = vadd.f32 %v805, %v821
  %v826 = vadd.f32 %v806, %v822
  %vm827 = vcmp.gt.f32.partialorder %v826, 1.0
  %v828 = vsel %vm827, 1, 0
  %v829 = vcvt.s32.f32 %v828
  %s830 = scalar_lea.vmem %s4, 864
  %v831 = vld [vmem:[%s830] sm:$0xff]
  %v832 = vld [vmem:[%s830 + $0x8] sm:$0xff]
  %v833 = vld [vmem:[%s830 + $0x10] sm:$0xff]
  %v834 = vld [vmem:[%s830 + $0x18] sm:$0xff]
  %v835 = vlaneseq
  %v836 = vshrl.u32 %v835, 7
  %v837 = vsub.s32 3, %v836
  %v838 = vrot.slane %v829, %v837
  %v839 = vmul.f32 %v838, %v831
  %v840 = vmul.f32 %v838, %v832
  %v841 = vmul.f32 %v838, %v833
  %v842 = vmul.f32 %v838, %v834
  %v843 = vadd.f32 %v823, %v839
  %v844 = vadd.f32 %v824, %v840
  %v845 = vadd.f32 %v825, %v841
  %v846 = vadd.f32 %v826, %v842
  %vm847 = vcmp.gt.f32.partialorder %v846, 1.0
  %v848 = vsel %vm847, 1, 0
  %v849 = vcvt.s32.f32 %v848
  %s850 = scalar_lea.vmem %s4, 896
  %v851 = vld [vmem:[%s850] sm:$0xff]
  %v852 = vld [vmem:[%s850 + $0x8] sm:$0xff]
  %v853 = vld [vmem:[%s850 + $0x10] sm:$0xff]
  %v854 = vld [vmem:[%s850 + $0x18] sm:$0xff]
  %v855 = vlaneseq
  %v856 = vshrl.u32 %v855, 7
  %v857 = vsub.s32 4, %v856
  %v858 = vrot.slane %v849, %v857
  %v859 = vmul.f32 %v858, %v851
  %v860 = vmul.f32 %v858, %v852
  %v861 = vmul.f32 %v858, %v853
  %v862 = vmul.f32 %v858, %v854
  %v863 = vadd.f32 %v843, %v859
  %v864 = vadd.f32 %v844, %v860
  %v865 = vadd.f32 %v845, %v861
  %v866 = vadd.f32 %v846, %v862
  %vm867 = vcmp.gt.f32.partialorder %v866, 1.0
  %v868 = vsel %vm867, 1, 0
  %v869 = vcvt.s32.f32 %v868
  %s870 = scalar_lea.vmem %s4, 928
  %v871 = vld [vmem:[%s870] sm:$0xff]
  %v872 = vld [vmem:[%s870 + $0x8] sm:$0xff]
  %v873 = vld [vmem:[%s870 + $0x10] sm:$0xff]
  %v874 = vld [vmem:[%s870 + $0x18] sm:$0xff]
  %v875 = vlaneseq
  %v876 = vshrl.u32 %v875, 7
  %v877 = vsub.s32 5, %v876
  %v878 = vrot.slane %v869, %v877
  %v879 = vmul.f32 %v878, %v871
  %v880 = vmul.f32 %v878, %v872
  %v881 = vmul.f32 %v878, %v873
  %v882 = vmul.f32 %v878, %v874
  %v883 = vadd.f32 %v863, %v879
  %v884 = vadd.f32 %v864, %v880
  %v885 = vadd.f32 %v865, %v881
  %v886 = vadd.f32 %v866, %v882
  %vm887 = vcmp.gt.f32.partialorder %v883, 1.0
  %vm888 = vcmp.gt.f32.partialorder %v884, 1.0
  %vm889 = vcmp.gt.f32.partialorder %v885, 1.0
  %vm890 = vcmp.gt.f32.partialorder %v886, 1.0
  %v891 = vsel %vm887, 1, 0
  %v892 = vsel %vm888, 1, 0
  %v893 = vsel %vm889, 1, 0
  %v894 = vsel %vm890, 1, 0
  %v895 = vcvt.s32.f32 %v891
  %v896 = vcvt.s32.f32 %v892
  %v897 = vcvt.s32.f32 %v893
  %v898 = vcvt.s32.f32 %v894
  %v899 = vsel %vm32, 1, 0
  %v900 = vsel %vm33, 1, 0
  %v901 = vsel %vm34, 1, 0
  %v902 = vsel %vm35, 1, 0
  %vm903 = vcmp.eq.s32.totalorder %v899, 1
  %vm904 = vcmp.eq.s32.totalorder %v900, 1
  %vm905 = vcmp.eq.s32.totalorder %v901, 1
  %vm906 = vcmp.eq.s32.totalorder %v902, 1
  %v907 = vsel %vm903, %v895, 0.0
  %v908 = vsel %vm904, %v896, 0.0
  %v909 = vsel %vm905, %v897, 0.0
  %v910 = vsel %vm906, %v898, 0.0
  %v911 = vld [vmem:[%s2] sm:$0xff]
  %v912 = vld [vmem:[%s2 + $0x8] sm:$0xff]
  %v913 = vld [vmem:[%s2 + $0x10] sm:$0xff]
  %v914 = vld [vmem:[%s2 + $0x18] sm:$0x1]
  %vm915 = vcmask 203776
  %v917 = vsel %vm915, %v907, 0
  %v920 = vsel %vm915, %v908, 0
  %v923 = vsel %vm915, %v909, 0
  %v926 = vsel %vm915, %v910, 0
  %vm928 = vcmask 1040384
  %v930 = vsel %vm928, %v914, 0
  %932 = vmatprep.subr.mxu0 0.0
  %933 = vmatpush1.msra.mxu0 %v911
  %934 = vmatprep.subr.mxu0 0.0
  %935 = vmatpush1.msra.mxu0 %v912
  %936 = vmatprep.subr.mxu0 0.0
  %937 = vmatpush1.msra.mxu0 %v913
  %938 = vmatprep.subr.mxu0 0.0
  %939 = vmatpush1.msra.mxu0 %v930
  %940 = vmatprep.subr.mxu0 0.0
  %941 = vmatpush1.msra.mxu0 0.0
  %942 = vmatprep.subr.mxu0 0.0
  %943 = vmatpush1.msra.mxu0 0.0
  %944 = vmatprep.subr.mxu0 0.0
  %945 = vmatpush1.msra.mxu0 0.0
  %946 = vmatprep.subr.mxu0 0.0
  %947 = vmatpush1.msra.mxu0 0.0
  %948 = vmatprep.subr.mxu0 0.0
  %949 = vmatpush1.msra.mxu0 0.0
  %950 = vmatprep.subr.mxu0 0.0
  %951 = vmatpush1.msra.mxu0 0.0
  %952 = vmatprep.subr.mxu0 0.0
  %953 = vmatpush1.msra.mxu0 0.0
  %954 = vmatprep.subr.mxu0 0.0
  %955 = vmatpush1.msra.mxu0 0.0
  %956 = vmatprep.subr.mxu0 0.0
  %957 = vmatpush1.msra.mxu0 0.0
  %958 = vmatprep.subr.mxu0 0.0
  %959 = vmatpush1.msra.mxu0 0.0
  %960 = vmatprep.subr.mxu0 0.0
  %961 = vmatpush1.msra.mxu0 0.0
  %962 = vmatprep.subr.mxu0 0.0
  %963 = vmatpush1.msra.mxu0 0.0
  %964 = vmatprep.subr.mxu0 0.0
  %965 = vmatpush1.msra.mxu0 0.0
  %966 = vmatprep.subr.mxu0 0.0
  %967 = vmatpush1.msra.mxu0 0.0
  %968 = vmatprep.subr.mxu0 0.0
  %969 = vmatpush1.msra.mxu0 0.0
  %970 = vmatprep.subr.mxu0 0.0
  %971 = vmatpush1.msra.mxu0 0.0
  %972 = vmatprep.subr.mxu0 0.0
  %973 = vmatpush1.msra.mxu0 0.0
  %974 = vmatprep.subr.mxu0 0.0
  %975 = vmatpush1.msra.mxu0 0.0
  %976 = vmatprep.subr.mxu0 0.0
  %977 = vmatpush1.msra.mxu0 0.0
  %978 = vmatprep.subr.mxu0 0.0
  %979 = vmatpush1.msra.mxu0 0.0
  %980 = vmatprep.subr.mxu0 0.0
  %981 = vmatpush1.msra.mxu0 0.0
  %982 = vmatprep.subr.mxu0 0.0
  %983 = vmatpush1.msra.mxu0 0.0
  %984 = vmatprep.subr.mxu0 0.0
  %985 = vmatpush1.msra.mxu0 0.0
  %986 = vmatprep.subr.mxu0 0.0
  %987 = vmatpush1.msra.mxu0 0.0
  %988 = vmatprep.subr.mxu0 0.0
  %989 = vmatpush1.msra.mxu0 0.0
  %990 = vmatprep.subr.mxu0 0.0
  %991 = vmatpush1.msra.mxu0 0.0
  %992 = vmatprep.subr.mxu0 0.0
  %993 = vmatpush1.msra.mxu0 0.0
  %994 = vmatprep.subr.mxu0 0.0
  %995 = vmatpush1.msra.mxu0 0.0
  %996 = vmatprep.mubr.f32.mxu0 0.0
  %997 = vmatmul.mubr.f32.gmra.mrb[0].mxu0 %v917
  %v998 = vpop.f32.mrb[0].mxu0
  %v999 = vadd.f32 0.0, %v998
  %v1000 = vpop.f32.mrb[0].mxu0
  %1001 = vmatprep.mubr.f32.mxu0 0.0
  %1002 = vmatmul.mubr.f32.gmra.mrb[0].mxu0 %v920
  %v1003 = vpop.f32.mrb[0].mxu0
  %v1004 = vadd.f32 0.0, %v1003
  %v1005 = vpop.f32.mrb[0].mxu0
  %1006 = vmatprep.mubr.f32.mxu0 0.0
  %1007 = vmatmul.mubr.f32.gmra.mrb[0].mxu0 %v923
  %v1008 = vpop.f32.mrb[0].mxu0
  %v1009 = vadd.f32 0.0, %v1008
  %v1010 = vpop.f32.mrb[0].mxu0
  %1011 = vmatprep.mubr.f32.mxu0 0.0
  %1012 = vmatmul.mubr.f32.gmra.mrb[0].mxu0 %v926
  %v1013 = vpop.f32.mrb[0].mxu0
  %v1014 = vadd.f32 0.0, %v1013
  %v1015 = vpop.f32.mrb[0].mxu0
  %1016 = vdwg.mxu0
  %1017 = vmatprep.subr.mxu0 0.0
  %1018 = vmatpush1.msra.mxu0 %v999
  %1019 = vmatprep.subr.mxu0 0.0
  %1020 = vmatpush1.msra.mxu0 %v1004
  %1021 = vmatprep.subr.mxu0 0.0
  %1022 = vmatpush1.msra.mxu0 %v1009
  %1023 = vmatprep.subr.mxu0 0.0
  %1024 = vmatpush1.msra.mxu0 %v1014
  %1025 = vmatprep.subr.mxu0 0.0
  %1026 = vmatpush1.msra.mxu0 0.0
  %1027 = vmatprep.subr.mxu0 0.0
  %1028 = vmatpush1.msra.mxu0 0.0
  %1029 = vmatprep.subr.mxu0 0.0
  %1030 = vmatpush1.msra.mxu0 0.0
  %1031 = vmatprep.subr.mxu0 0.0
  %1032 = vmatpush1.msra.mxu0 0.0
  %1033 = vmatprep.subr.mxu0 0.0
  %1034 = vmatpush1.msra.mxu0 0.0
  %1035 = vmatprep.subr.mxu0 0.0
  %1036 = vmatpush1.msra.mxu0 0.0
  %1037 = vmatprep.subr.mxu0 0.0
  %1038 = vmatpush1.msra.mxu0 0.0
  %1039 = vmatprep.subr.mxu0 0.0
  %1040 = vmatpush1.msra.mxu0 0.0
  %1041 = vmatprep.subr.mxu0 0.0
  %1042 = vmatpush1.msra.mxu0 0.0
  %1043 = vmatprep.subr.mxu0 0.0
  %1044 = vmatpush1.msra.mxu0 0.0
  %1045 = vmatprep.subr.mxu0 0.0
  %1046 = vmatpush1.msra.mxu0 0.0
  %1047 = vmatprep.subr.mxu0 0.0
  %1048 = vmatpush1.msra.mxu0 0.0
  %1049 = vmatprep.subr.mxu0 0.0
  %1050 = vmatpush1.msra.mxu0 0.0
  %1051 = vmatprep.subr.mxu0 0.0
  %1052 = vmatpush1.msra.mxu0 0.0
  %1053 = vmatprep.subr.mxu0 0.0
  %1054 = vmatpush1.msra.mxu0 0.0
  %1055 = vmatprep.subr.mxu0 0.0
  %1056 = vmatpush1.msra.mxu0 0.0
  %1057 = vmatprep.subr.mxu0 0.0
  %1058 = vmatpush1.msra.mxu0 0.0
  %1059 = vmatprep.subr.mxu0 0.0
  %1060 = vmatpush1.msra.mxu0 0.0
  %1061 = vmatprep.subr.mxu0 0.0
  %1062 = vmatpush1.msra.mxu0 0.0
  %1063 = vmatprep.subr.mxu0 0.0
  %1064 = vmatpush1.msra.mxu0 0.0
  %1065 = vmatprep.subr.mxu0 0.0
  %1066 = vmatpush1.msra.mxu0 0.0
  %1067 = vmatprep.subr.mxu0 0.0
  %1068 = vmatpush1.msra.mxu0 0.0
  %1069 = vmatprep.subr.mxu0 0.0
  %1070 = vmatpush1.msra.mxu0 0.0
  %1071 = vmatprep.subr.mxu0 0.0
  %1072 = vmatpush1.msra.mxu0 0.0
  %1073 = vmatprep.subr.mxu0 0.0
  %1074 = vmatpush1.msra.mxu0 0.0
  %1075 = vmatprep.subr.mxu0 0.0
  %1076 = vmatpush1.msra.mxu0 0.0
  %1077 = vmatprep.subr.mxu0 0.0
  %1078 = vmatpush1.msra.mxu0 0.0
  %1079 = vmatprep.subr.mxu0 0.0
  %1080 = vmatpush1.msra.mxu0 0.0
  %1081 = vmatprep.mubr.f32.mxu0 0.0
  %1082 = vmatmul.mubr.f32.gmra.mrb[0].mxu0 %v180
  %v1083 = vpop.f32.mrb[0].mxu0
  %v1084 = vadd.f32 0.0, %v1083
  %v1085 = vpop.f32.mrb[0].mxu0
  %1086 = vmatprep.mubr.f32.mxu0 0.0
  %1087 = vmatmul.mubr.f32.gmra.mrb[0].mxu0 %v183
  %v1088 = vpop.f32.mrb[0].mxu0
  %v1089 = vadd.f32 0.0, %v1088
  %v1090 = vpop.f32.mrb[0].mxu0
  %1091 = vmatprep.mubr.f32.mxu0 0.0
  %1092 = vmatmul.mubr.f32.gmra.mrb[0].mxu0 %v186
  %v1093 = vpop.f32.mrb[0].mxu0
  %v1094 = vadd.f32 0.0, %v1093
  %v1095 = vpop.f32.mrb[0].mxu0
  %1096 = vmatprep.mubr.f32.mxu0 0.0
  %1097 = vmatmul.mubr.f32.gmra.mrb[0].mxu0 %v189
  %v1098 = vpop.f32.mrb[0].mxu0
  %v1099 = vadd.f32 0.0, %v1098
  %v1100 = vpop.f32.mrb[0].mxu0
  %1101 = vdwg.mxu0
  %vm1102 = vcmp.gt.f32.partialorder %v1084, 1.0
  %v1103 = vsel %vm1102, 1, 0
  %v1104 = vcvt.s32.f32 %v1103
  %v1105 = vld [vmem:[%s5] sm:$0xff]
  %v1106 = vld [vmem:[%s5 + $0x8] sm:$0xff]
  %v1107 = vld [vmem:[%s5 + $0x10] sm:$0xff]
  %v1108 = vld [vmem:[%s5 + $0x18] sm:$0xff]
  %v1109 = vlaneseq
  %v1110 = vshrl.u32 %v1109, 7
  %v1111 = vsub.s32 0, %v1110
  %v1112 = vrot.slane %v1104, %v1111
  %v1113 = vmul.f32 %v1112, %v1105
  %v1114 = vmul.f32 %v1112, %v1106
  %v1115 = vmul.f32 %v1112, %v1107
  %v1116 = vmul.f32 %v1112, %v1108
  %v1117 = vadd.f32 %v1084, %v1113
  %v1118 = vadd.f32 %v1089, %v1114
  %v1119 = vadd.f32 %v1094, %v1115
  %v1120 = vadd.f32 %v1099, %v1116
  %vm1121 = vcmp.gt.f32.partialorder %v1117, 1.0
  %v1122 = vsel %vm1121, 1, 0
  %v1123 = vcvt.s32.f32 %v1122
  %s1124 = scalar_lea.vmem %s5, 32
  %v1125 = vld [vmem:[%s1124] sm:$0xff]
  %v1126 = vld [vmem:[%s1124 + $0x8] sm:$0xff]
  %v1127 = vld [vmem:[%s1124 + $0x10] sm:$0xff]
  %v1128 = vld [vmem:[%s1124 + $0x18] sm:$0xff]
  %v1129 = vlaneseq
  %v1130 = vshrl.u32 %v1129, 7
  %v1131 = vsub.s32 1, %v1130
  %v1132 = vrot.slane %v1123, %v1131
  %v1133 = vmul.f32 %v1132, %v1125
  %v1134 = vmul.f32 %v1132, %v1126
  %v1135 = vmul.f32 %v1132, %v1127
  %v1136 = vmul.f32 %v1132, %v1128
  %v1137 = vadd.f32 %v1117, %v1133
  %v1138 = vadd.f32 %v1118, %v1134
  %v1139 = vadd.f32 %v1119, %v1135
  %v1140 = vadd.f32 %v1120, %v1136
  %vm1141 = vcmp.gt.f32.partialorder %v1137, 1.0
  %v1142 = vsel %vm1141, 1, 0
  %v1143 = vcvt.s32.f32 %v1142
  %s1144 = scalar_lea.vmem %s5, 64
  %v1145 = vld [vmem:[%s1144] sm:$0xff]
  %v1146 = vld [vmem:[%s1144 + $0x8] sm:$0xff]
  %v1147 = vld [vmem:[%s1144 + $0x10] sm:$0xff]
  %v1148 = vld [vmem:[%s1144 + $0x18] sm:$0xff]
  %v1149 = vlaneseq
  %v1150 = vshrl.u32 %v1149, 7
  %v1151 = vsub.s32 2, %v1150
  %v1152 = vrot.slane %v1143, %v1151
  %v1153 = vmul.f32 %v1152, %v1145
  %v1154 = vmul.f32 %v1152, %v1146
  %v1155 = vmul.f32 %v1152, %v1147
  %v1156 = vmul.f32 %v1152, %v1148
  %v1157 = vadd.f32 %v1137, %v1153
  %v1158 = vadd.f32 %v1138, %v1154
  %v1159 = vadd.f32 %v1139, %v1155
  %v1160 = vadd.f32 %v1140, %v1156
  %vm1161 = vcmp.gt.f32.partialorder %v1157, 1.0
  %v1162 = vsel %vm1161, 1, 0
  %v1163 = vcvt.s32.f32 %v1162
  %s1164 = scalar_lea.vmem %s5, 96
  %v1165 = vld [vmem:[%s1164] sm:$0xff]
  %v1166 = vld [vmem:[%s1164 + $0x8] sm:$0xff]
  %v1167 = vld [vmem:[%s1164 + $0x10] sm:$0xff]
  %v1168 = vld [vmem:[%s1164 + $0x18] sm:$0xff]
  %v1169 = vlaneseq
  %v1170 = vshrl.u32 %v1169, 7
  %v1171 = vsub.s32 3, %v1170
  %v1172 = vrot.slane %v1163, %v1171
  %v1173 = vmul.f32 %v1172, %v1165
  %v1174 = vmul.f32 %v1172, %v1166
  %v1175 = vmul.f32 %v1172, %v1167
  %v1176 = vmul.f32 %v1172, %v1168
  %v1177 = vadd.f32 %v1157, %v1173
  %v1178 = vadd.f32 %v1158, %v1174
  %v1179 = vadd.f32 %v1159, %v1175
  %v1180 = vadd.f32 %v1160, %v1176
  %vm1181 = vcmp.gt.f32.partialorder %v1177, 1.0
  %v1182 = vsel %vm1181, 1, 0
  %v1183 = vcvt.s32.f32 %v1182
  %s1184 = scalar_lea.vmem %s5, 128
  %v1185 = vld [vmem:[%s1184] sm:$0xff]
  %v1186 = vld [vmem:[%s1184 + $0x8] sm:$0xff]
  %v1187 = vld [vmem:[%s1184 + $0x10] sm:$0xff]
  %v1188 = vld [vmem:[%s1184 + $0x18] sm:$0xff]
  %v1189 = vlaneseq
  %v1190 = vshrl.u32 %v1189, 7
  %v1191 = vsub.s32 4, %v1190
  %v1192 = vrot.slane %v1183, %v1191
  %v1193 = vmul.f32 %v1192, %v1185
  %v1194 = vmul.f32 %v1192, %v1186
  %v1195 = vmul.f32 %v1192, %v1187
  %v1196 = vmul.f32 %v1192, %v1188
  %v1197 = vadd.f32 %v1177, %v1193
  %v1198 = vadd.f32 %v1178, %v1194
  %v1199 = vadd.f32 %v1179, %v1195
  %v1200 = vadd.f32 %v1180, %v1196
  %vm1201 = vcmp.gt.f32.partialorder %v1197, 1.0
  %v1202 = vsel %vm1201, 1, 0
  %v1203 = vcvt.s32.f32 %v1202
  %s1204 = scalar_lea.vmem %s5, 160
  %v1205 = vld [vmem:[%s1204] sm:$0xff]
  %v1206 = vld [vmem:[%s1204 + $0x8] sm:$0xff]
  %v1207 = vld [vmem:[%s1204 + $0x10] sm:$0xff]
  %v1208 = vld [vmem:[%s1204 + $0x18] sm:$0xff]
  %v1209 = vlaneseq
  %v1210 = vshrl.u32 %v1209, 7
  %v1211 = vsub.s32 5, %v1210
  %v1212 = vrot.slane %v1203, %v1211
  %v1213 = vmul.f32 %v1212, %v1205
  %v1214 = vmul.f32 %v1212, %v1206
  %v1215 = vmul.f32 %v1212, %v1207
  %v1216 = vmul.f32 %v1212, %v1208
  %v1217 = vadd.f32 %v1197, %v1213
  %v1218 = vadd.f32 %v1198, %v1214
  %v1219 = vadd.f32 %v1199, %v1215
  %v1220 = vadd.f32 %v1200, %v1216
  %vm1221 = vcmp.gt.f32.partialorder %v1217, 1.0
  %v1222 = vsel %vm1221, 1, 0
  %v1223 = vcvt.s32.f32 %v1222
  %s1224 = scalar_lea.vmem %s5, 192
  %v1225 = vld [vmem:[%s1224] sm:$0xff]
  %v1226 = vld [vmem:[%s1224 + $0x8] sm:$0xff]
  %v1227 = vld [vmem:[%s1224 + $0x10] sm:$0xff]
  %v1228 = vld [vmem:[%s1224 + $0x18] sm:$0xff]
  %v1229 = vlaneseq
  %v1230 = vshrl.u32 %v1229, 7
  %v1231 = vsub.s32 6, %v1230
  %v1232 = vrot.slane %v1223, %v1231
  %v1233 = vmul.f32 %v1232, %v1225
  %v1234 = vmul.f32 %v1232, %v1226
  %v1235 = vmul.f32 %v1232, %v1227
  %v1236 = vmul.f32 %v1232, %v1228
  %v1237 = vadd.f32 %v1217, %v1233
  %v1238 = vadd.f32 %v1218, %v1234
  %v1239 = vadd.f32 %v1219, %v1235
  %v1240 = vadd.f32 %v1220, %v1236
  %vm1241 = vcmp.gt.f32.partialorder %v1237, 1.0
  %v1242 = vsel %vm1241, 1, 0
  %v1243 = vcvt.s32.f32 %v1242
  %s1244 = scalar_lea.vmem %s5, 224
  %v1245 = vld [vmem:[%s1244] sm:$0xff]
  %v1246 = vld [vmem:[%s1244 + $0x8] sm:$0xff]
  %v1247 = vld [vmem:[%s1244 + $0x10] sm:$0xff]
  %v1248 = vld [vmem:[%s1244 + $0x18] sm:$0xff]
  %v1249 = vlaneseq
  %v1250 = vshrl.u32 %v1249, 7
  %v1251 = vsub.s32 7, %v1250
  %v1252 = vrot.slane %v1243, %v1251
  %v1253 = vmul.f32 %v1252, %v1245
  %v1254 = vmul.f32 %v1252, %v1246
  %v1255 = vmul.f32 %v1252, %v1247
  %v1256 = vmul.f32 %v1252, %v1248
  %v1257 = vadd.f32 %v1237, %v1253
  %v1258 = vadd.f32 %v1238, %v1254
  %v1259 = vadd.f32 %v1239, %v1255
  %v1260 = vadd.f32 %v1240, %v1256
  %vm1261 = vcmp.gt.f32.partialorder %v1258, 1.0
  %v1262 = vsel %vm1261, 1, 0
  %v1263 = vcvt.s32.f32 %v1262
  %s1264 = scalar_lea.vmem %s5, 256
  %v1265 = vld [vmem:[%s1264] sm:$0xff]
  %v1266 = vld [vmem:[%s1264 + $0x8] sm:$0xff]
  %v1267 = vld [vmem:[%s1264 + $0x10] sm:$0xff]
  %v1268 = vld [vmem:[%s1264 + $0x18] sm:$0xff]
  %v1269 = vlaneseq
  %v1270 = vshrl.u32 %v1269, 7
  %v1271 = vsub.s32 0, %v1270
  %v1272 = vrot.slane %v1263, %v1271
  %v1273 = vmul.f32 %v1272, %v1265
  %v1274 = vmul.f32 %v1272, %v1266
  %v1275 = vmul.f32 %v1272, %v1267
  %v1276 = vmul.f32 %v1272, %v1268
  %v1277 = vadd.f32 %v1257, %v1273
  %v1278 = vadd.f32 %v1258, %v1274
  %v1279 = vadd.f32 %v1259, %v1275
  %v1280 = vadd.f32 %v1260, %v1276
  %vm1281 = vcmp.gt.f32.partialorder %v1278, 1.0
  %v1282 = vsel %vm1281, 1, 0
  %v1283 = vcvt.s32.f32 %v1282
  %s1284 = scalar_lea.vmem %s5, 288
  %v1285 = vld [vmem:[%s1284] sm:$0xff]
  %v1286 = vld [vmem:[%s1284 + $0x8] sm:$0xff]
  %v1287 = vld [vmem:[%s1284 + $0x10] sm:$0xff]
  %v1288 = vld [vmem:[%s1284 + $0x18] sm:$0xff]
  %v1289 = vlaneseq
  %v1290 = vshrl.u32 %v1289, 7
  %v1291 = vsub.s32 1, %v1290
  %v1292 = vrot.slane %v1283, %v1291
  %v1293 = vmul.f32 %v1292, %v1285
  %v1294 = vmul.f32 %v1292, %v1286
  %v1295 = vmul.f32 %v1292, %v1287
  %v1296 = vmul.f32 %v1292, %v1288
  %v1297 = vadd.f32 %v1277, %v1293
  %v1298 = vadd.f32 %v1278, %v1294
  %v1299 = vadd.f32 %v1279, %v1295
  %v1300 = vadd.f32 %v1280, %v1296
  %vm1301 = vcmp.gt.f32.partialorder %v1298, 1.0
  %v1302 = vsel %vm1301, 1, 0
  %v1303 = vcvt.s32.f32 %v1302
  %s1304 = scalar_lea.vmem %s5, 320
  %v1305 = vld [vmem:[%s1304] sm:$0xff]
  %v1306 = vld [vmem:[%s1304 + $0x8] sm:$0xff]
  %v1307 = vld [vmem:[%s1304 + $0x10] sm:$0xff]
  %v1308 = vld [vmem:[%s1304 + $0x18] sm:$0xff]
  %v1309 = vlaneseq
  %v1310 = vshrl.u32 %v1309, 7
  %v1311 = vsub.s32 2, %v1310
  %v1312 = vrot.slane %v1303, %v1311
  %v1313 = vmul.f32 %v1312, %v1305
  %v1314 = vmul.f32 %v1312, %v1306
  %v1315 = vmul.f32 %v1312, %v1307
  %v1316 = vmul.f32 %v1312, %v1308
  %v1317 = vadd.f32 %v1297, %v1313
  %v1318 = vadd.f32 %v1298, %v1314
  %v1319 = vadd.f32 %v1299, %v1315
  %v1320 = vadd.f32 %v1300, %v1316
  %vm1321 = vcmp.gt.f32.partialorder %v1318, 1.0
  %v1322 = vsel %vm1321, 1, 0
  %v1323 = vcvt.s32.f32 %v1322
  %s1324 = scalar_lea.vmem %s5, 352
  %v1325 = vld [vmem:[%s1324] sm:$0xff]
  %v1326 = vld [vmem:[%s1324 + $0x8] sm:$0xff]
  %v1327 = vld [vmem:[%s1324 + $0x10] sm:$0xff]
  %v1328 = vld [vmem:[%s1324 + $0x18] sm:$0xff]
  %v1329 = vlaneseq
  %v1330 = vshrl.u32 %v1329, 7
  %v1331 = vsub.s32 3, %v1330
  %v1332 = vrot.slane %v1323, %v1331
  %v1333 = vmul.f32 %v1332, %v1325
  %v1334 = vmul.f32 %v1332, %v1326
  %v1335 = vmul.f32 %v1332, %v1327
  %v1336 = vmul.f32 %v1332, %v1328
  %v1337 = vadd.f32 %v1317, %v1333
  %v1338 = vadd.f32 %v1318, %v1334
  %v1339 = vadd.f32 %v1319, %v1335
  %v1340 = vadd.f32 %v1320, %v1336
  %vm1341 = vcmp.gt.f32.partialorder %v1338, 1.0
  %v1342 = vsel %vm1341, 1, 0
  %v1343 = vcvt.s32.f32 %v1342
  %s1344 = scalar_lea.vmem %s5, 384
  %v1345 = vld [vmem:[%s1344] sm:$0xff]
  %v1346 = vld [vmem:[%s1344 + $0x8] sm:$0xff]
  %v1347 = vld [vmem:[%s1344 + $0x10] sm:$0xff]
  %v1348 = vld [vmem:[%s1344 + $0x18] sm:$0xff]
  %v1349 = vlaneseq
  %v1350 = vshrl.u32 %v1349, 7
  %v1351 = vsub.s32 4, %v1350
  %v1352 = vrot.slane %v1343, %v1351
  %v1353 = vmul.f32 %v1352, %v1345
  %v1354 = vmul.f32 %v1352, %v1346
  %v1355 = vmul.f32 %v1352, %v1347
  %v1356 = vmul.f32 %v1352, %v1348
  %v1357 = vadd.f32 %v1337, %v1353
  %v1358 = vadd.f32 %v1338, %v1354
  %v1359 = vadd.f32 %v1339, %v1355
  %v1360 = vadd.f32 %v1340, %v1356
  %vm1361 = vcmp.gt.f32.partialorder %v1358, 1.0
  %v1362 = vsel %vm1361, 1, 0
  %v1363 = vcvt.s32.f32 %v1362
  %s1364 = scalar_lea.vmem %s5, 416
  %v1365 = vld [vmem:[%s1364] sm:$0xff]
  %v1366 = vld [vmem:[%s1364 + $0x8] sm:$0xff]
  %v1367 = vld [vmem:[%s1364 + $0x10] sm:$0xff]
  %v1368 = vld [vmem:[%s1364 + $0x18] sm:$0xff]
  %v1369 = vlaneseq
  %v1370 = vshrl.u32 %v1369, 7
  %v1371 = vsub.s32 5, %v1370
  %v1372 = vrot.slane %v1363, %v1371
  %v1373 = vmul.f32 %v1372, %v1365
  %v1374 = vmul.f32 %v1372, %v1366
  %v1375 = vmul.f32 %v1372, %v1367
  %v1376 = vmul.f32 %v1372, %v1368
  %v1377 = vadd.f32 %v1357, %v1373
  %v1378 = vadd.f32 %v1358, %v1374
  %v1379 = vadd.f32 %v1359, %v1375
  %v1380 = vadd.f32 %v1360, %v1376
  %vm1381 = vcmp.gt.f32.partialorder %v1378, 1.0
  %v1382 = vsel %vm1381, 1, 0
  %v1383 = vcvt.s32.f32 %v1382
  %s1384 = scalar_lea.vmem %s5, 448
  %v1385 = vld [vmem:[%s1384] sm:$0xff]
  %v1386 = vld [vmem:[%s1384 + $0x8] sm:$0xff]
  %v1387 = vld [vmem:[%s1384 + $0x10] sm:$0xff]
  %v1388 = vld [vmem:[%s1384 + $0x18] sm:$0xff]
  %v1389 = vlaneseq
  %v1390 = vshrl.u32 %v1389, 7
  %v1391 = vsub.s32 6, %v1390
  %v1392 = vrot.slane %v1383, %v1391
  %v1393 = vmul.f32 %v1392, %v1385
  %v1394 = vmul.f32 %v1392, %v1386
  %v1395 = vmul.f32 %v1392, %v1387
  %v1396 = vmul.f32 %v1392, %v1388
  %v1397 = vadd.f32 %v1377, %v1393
  %v1398 = vadd.f32 %v1378, %v1394
  %v1399 = vadd.f32 %v1379, %v1395
  %v1400 = vadd.f32 %v1380, %v1396
  %vm1401 = vcmp.gt.f32.partialorder %v1398, 1.0
  %v1402 = vsel %vm1401, 1, 0
  %v1403 = vcvt.s32.f32 %v1402
  %s1404 = scalar_lea.vmem %s5, 480
  %v1405 = vld [vmem:[%s1404] sm:$0xff]
  %v1406 = vld [vmem:[%s1404 + $0x8] sm:$0xff]
  %v1407 = vld [vmem:[%s1404 + $0x10] sm:$0xff]
  %v1408 = vld [vmem:[%s1404 + $0x18] sm:$0xff]
  %v1409 = vlaneseq
  %v1410 = vshrl.u32 %v1409, 7
  %v1411 = vsub.s32 7, %v1410
  %v1412 = vrot.slane %v1403, %v1411
  %v1413 = vmul.f32 %v1412, %v1405
  %v1414 = vmul.f32 %v1412, %v1406
  %v1415 = vmul.f32 %v1412, %v1407
  %v1416 = vmul.f32 %v1412, %v1408
  %v1417 = vadd.f32 %v1397, %v1413
  %v1418 = vadd.f32 %v1398, %v1414
  %v1419 = vadd.f32 %v1399, %v1415
  %v1420 = vadd.f32 %v1400, %v1416
  %vm1421 = vcmp.gt.f32.partialorder %v1419, 1.0
  %v1422 = vsel %vm1421, 1, 0
  %v1423 = vcvt.s32.f32 %v1422
  %s1424 = scalar_lea.vmem %s5, 512
  %v1425 = vld [vmem:[%s1424] sm:$0xff]
  %v1426 = vld [vmem:[%s1424 + $0x8] sm:$0xff]
  %v1427 = vld [vmem:[%s1424 + $0x10] sm:$0xff]
  %v1428 = vld [vmem:[%s1424 + $0x18] sm:$0xff]
  %v1429 = vlaneseq
  %v1430 = vshrl.u32 %v1429, 7
  %v1431 = vsub.s32 0, %v1430
  %v1432 = vrot.slane %v1423, %v1431
  %v1433 = vmul.f32 %v1432, %v1425
  %v1434 = vmul.f32 %v1432, %v1426
  %v1435 = vmul.f32 %v1432, %v1427
  %v1436 = vmul.f32 %v1432, %v1428
  %v1437 = vadd.f32 %v1417, %v1433
  %v1438 = vadd.f32 %v1418, %v1434
  %v1439 = vadd.f32 %v1419, %v1435
  %v1440 = vadd.f32 %v1420, %v1436
  %vm1441 = vcmp.gt.f32.partialorder %v1439, 1.0
  %v1442 = vsel %vm1441, 1, 0
  %v1443 = vcvt.s32.f32 %v1442
  %s1444 = scalar_lea.vmem %s5, 544
  %v1445 = vld [vmem:[%s1444] sm:$0xff]
  %v1446 = vld [vmem:[%s1444 + $0x8] sm:$0xff]
  %v1447 = vld [vmem:[%s1444 + $0x10] sm:$0xff]
  %v1448 = vld [vmem:[%s1444 + $0x18] sm:$0xff]
  %v1449 = vlaneseq
  %v1450 = vshrl.u32 %v1449, 7
  %v1451 = vsub.s32 1, %v1450
  %v1452 = vrot.slane %v1443, %v1451
  %v1453 = vmul.f32 %v1452, %v1445
  %v1454 = vmul.f32 %v1452, %v1446
  %v1455 = vmul.f32 %v1452, %v1447
  %v1456 = vmul.f32 %v1452, %v1448
  %v1457 = vadd.f32 %v1437, %v1453
  %v1458 = vadd.f32 %v1438, %v1454
  %v1459 = vadd.f32 %v1439, %v1455
  %v1460 = vadd.f32 %v1440, %v1456
  %vm1461 = vcmp.gt.f32.partialorder %v1459, 1.0
  %v1462 = vsel %vm1461, 1, 0
  %v1463 = vcvt.s32.f32 %v1462
  %s1464 = scalar_lea.vmem %s5, 576
  %v1465 = vld [vmem:[%s1464] sm:$0xff]
  %v1466 = vld [vmem:[%s1464 + $0x8] sm:$0xff]
  %v1467 = vld [vmem:[%s1464 + $0x10] sm:$0xff]
  %v1468 = vld [vmem:[%s1464 + $0x18] sm:$0xff]
  %v1469 = vlaneseq
  %v1470 = vshrl.u32 %v1469, 7
  %v1471 = vsub.s32 2, %v1470
  %v1472 = vrot.slane %v1463, %v1471
  %v1473 = vmul.f32 %v1472, %v1465
  %v1474 = vmul.f32 %v1472, %v1466
  %v1475 = vmul.f32 %v1472, %v1467
  %v1476 = vmul.f32 %v1472, %v1468
  %v1477 = vadd.f32 %v1457, %v1473
  %v1478 = vadd.f32 %v1458, %v1474
  %v1479 = vadd.f32 %v1459, %v1475
  %v1480 = vadd.f32 %v1460, %v1476
  %vm1481 = vcmp.gt.f32.partialorder %v1479, 1.0
  %v1482 = vsel %vm1481, 1, 0
  %v1483 = vcvt.s32.f32 %v1482
  %s1484 = scalar_lea.vmem %s5, 608
  %v1485 = vld [vmem:[%s1484] sm:$0xff]
  %v1486 = vld [vmem:[%s1484 + $0x8] sm:$0xff]
  %v1487 = vld [vmem:[%s1484 + $0x10] sm:$0xff]
  %v1488 = vld [vmem:[%s1484 + $0x18] sm:$0xff]
  %v1489 = vlaneseq
  %v1490 = vshrl.u32 %v1489, 7
  %v1491 = vsub.s32 3, %v1490
  %v1492 = vrot.slane %v1483, %v1491
  %v1493 = vmul.f32 %v1492, %v1485
  %v1494 = vmul.f32 %v1492, %v1486
  %v1495 = vmul.f32 %v1492, %v1487
  %v1496 = vmul.f32 %v1492, %v1488
  %v1497 = vadd.f32 %v1477, %v1493
  %v1498 = vadd.f32 %v1478, %v1494
  %v1499 = vadd.f32 %v1479, %v1495
  %v1500 = vadd.f32 %v1480, %v1496
  %vm1501 = vcmp.gt.f32.partialorder %v1499, 1.0
  %v1502 = vsel %vm1501, 1, 0
  %v1503 = vcvt.s32.f32 %v1502
  %s1504 = scalar_lea.vmem %s5, 640
  %v1505 = vld [vmem:[%s1504] sm:$0xff]
  %v1506 = vld [vmem:[%s1504 + $0x8] sm:$0xff]
  %v1507 = vld [vmem:[%s1504 + $0x10] sm:$0xff]
  %v1508 = vld [vmem:[%s1504 + $0x18] sm:$0xff]
  %v1509 = vlaneseq
  %v1510 = vshrl.u32 %v1509, 7
  %v1511 = vsub.s32 4, %v1510
  %v1512 = vrot.slane %v1503, %v1511
  %v1513 = vmul.f32 %v1512, %v1505
  %v1514 = vmul.f32 %v1512, %v1506
  %v1515 = vmul.f32 %v1512, %v1507
  %v1516 = vmul.f32 %v1512, %v1508
  %v1517 = vadd.f32 %v1497, %v1513
  %v1518 = vadd.f32 %v1498, %v1514
  %v1519 = vadd.f32 %v1499, %v1515
  %v1520 = vadd.f32 %v1500, %v1516
  %vm1521 = vcmp.gt.f32.partialorder %v1519, 1.0
  %v1522 = vsel %vm1521, 1, 0
  %v1523 = vcvt.s32.f32 %v1522
  %s1524 = scalar_lea.vmem %s5, 672
  %v1525 = vld [vmem:[%s1524] sm:$0xff]
  %v1526 = vld [vmem:[%s1524 + $0x8] sm:$0xff]
  %v1527 = vld [vmem:[%s1524 + $0x10] sm:$0xff]
  %v1528 = vld [vmem:[%s1524 + $0x18] sm:$0xff]
  %v1529 = vlaneseq
  %v1530 = vshrl.u32 %v1529, 7
  %v1531 = vsub.s32 5, %v1530
  %v1532 = vrot.slane %v1523, %v1531
  %v1533 = vmul.f32 %v1532, %v1525
  %v1534 = vmul.f32 %v1532, %v1526
  %v1535 = vmul.f32 %v1532, %v1527
  %v1536 = vmul.f32 %v1532, %v1528
  %v1537 = vadd.f32 %v1517, %v1533
  %v1538 = vadd.f32 %v1518, %v1534
  %v1539 = vadd.f32 %v1519, %v1535
  %v1540 = vadd.f32 %v1520, %v1536
  %vm1541 = vcmp.gt.f32.partialorder %v1539, 1.0
  %v1542 = vsel %vm1541, 1, 0
  %v1543 = vcvt.s32.f32 %v1542
  %s1544 = scalar_lea.vmem %s5, 704
  %v1545 = vld [vmem:[%s1544] sm:$0xff]
  %v1546 = vld [vmem:[%s1544 + $0x8] sm:$0xff]
  %v1547 = vld [vmem:[%s1544 + $0x10] sm:$0xff]
  %v1548 = vld [vmem:[%s1544 + $0x18] sm:$0xff]
  %v1549 = vlaneseq
  %v1550 = vshrl.u32 %v1549, 7
  %v1551 = vsub.s32 6, %v1550
  %v1552 = vrot.slane %v1543, %v1551
  %v1553 = vmul.f32 %v1552, %v1545
  %v1554 = vmul.f32 %v1552, %v1546
  %v1555 = vmul.f32 %v1552, %v1547
  %v1556 = vmul.f32 %v1552, %v1548
  %v1557 = vadd.f32 %v1537, %v1553
  %v1558 = vadd.f32 %v1538, %v1554
  %v1559 = vadd.f32 %v1539, %v1555
  %v1560 = vadd.f32 %v1540, %v1556
  %vm1561 = vcmp.gt.f32.partialorder %v1559, 1.0
  %v1562 = vsel %vm1561, 1, 0
  %v1563 = vcvt.s32.f32 %v1562
  %s1564 = scalar_lea.vmem %s5, 736
  %v1565 = vld [vmem:[%s1564] sm:$0xff]
  %v1566 = vld [vmem:[%s1564 + $0x8] sm:$0xff]
  %v1567 = vld [vmem:[%s1564 + $0x10] sm:$0xff]
  %v1568 = vld [vmem:[%s1564 + $0x18] sm:$0xff]
  %v1569 = vlaneseq
  %v1570 = vshrl.u32 %v1569, 7
  %v1571 = vsub.s32 7, %v1570
  %v1572 = vrot.slane %v1563, %v1571
  %v1573 = vmul.f32 %v1572, %v1565
  %v1574 = vmul.f32 %v1572, %v1566
  %v1575 = vmul.f32 %v1572, %v1567
  %v1576 = vmul.f32 %v1572, %v1568
  %v1577 = vadd.f32 %v1557, %v1573
  %v1578 = vadd.f32 %v1558, %v1574
  %v1579 = vadd.f32 %v1559, %v1575
  %v1580 = vadd.f32 %v1560, %v1576
  %vm1581 = vcmp.gt.f32.partialorder %v1580, 1.0
  %v1582 = vsel %vm1581, 1, 0
  %v1583 = vcvt.s32.f32 %v1582
  %s1584 = scalar_lea.vmem %s5, 768
  %v1585 = vld [vmem:[%s1584] sm:$0xff]
  %v1586 = vld [vmem:[%s1584 + $0x8] sm:$0xff]
  %v1587 = vld [vmem:[%s1584 + $0x10] sm:$0xff]
  %v1588 = vld [vmem:[%s1584 + $0x18] sm:$0xff]
  %v1589 = vlaneseq
  %v1590 = vshrl.u32 %v1589, 7
  %v1591 = vsub.s32 0, %v1590
  %v1592 = vrot.slane %v1583, %v1591
  %v1593 = vmul.f32 %v1592, %v1585
  %v1594 = vmul.f32 %v1592, %v1586
  %v1595 = vmul.f32 %v1592, %v1587
  %v1596 = vmul.f32 %v1592, %v1588
  %v1597 = vadd.f32 %v1577, %v1593
  %v1598 = vadd.f32 %v1578, %v1594
  %v1599 = vadd.f32 %v1579, %v1595
  %v1600 = vadd.f32 %v1580, %v1596
  %vm1601 = vcmp.gt.f32.partialorder %v1600, 1.0
  %v1602 = vsel %vm1601, 1, 0
  %v1603 = vcvt.s32.f32 %v1602
  %s1604 = scalar_lea.vmem %s5, 800
  %v1605 = vld [vmem:[%s1604] sm:$0xff]
  %v1606 = vld [vmem:[%s1604 + $0x8] sm:$0xff]
  %v1607 = vld [vmem:[%s1604 + $0x10] sm:$0xff]
  %v1608 = vld [vmem:[%s1604 + $0x18] sm:$0xff]
  %v1609 = vlaneseq
  %v1610 = vshrl.u32 %v1609, 7
  %v1611 = vsub.s32 1, %v1610
  %v1612 = vrot.slane %v1603, %v1611
  %v1613 = vmul.f32 %v1612, %v1605
  %v1614 = vmul.f32 %v1612, %v1606
  %v1615 = vmul.f32 %v1612, %v1607
  %v1616 = vmul.f32 %v1612, %v1608
  %v1617 = vadd.f32 %v1597, %v1613
  %v1618 = vadd.f32 %v1598, %v1614
  %v1619 = vadd.f32 %v1599, %v1615
  %v1620 = vadd.f32 %v1600, %v1616
  %vm1621 = vcmp.gt.f32.partialorder %v1620, 1.0
  %v1622 = vsel %vm1621, 1, 0
  %v1623 = vcvt.s32.f32 %v1622
  %s1624 = scalar_lea.vmem %s5, 832
  %v1625 = vld [vmem:[%s1624] sm:$0xff]
  %v1626 = vld [vmem:[%s1624 + $0x8] sm:$0xff]
  %v1627 = vld [vmem:[%s1624 + $0x10] sm:$0xff]
  %v1628 = vld [vmem:[%s1624 + $0x18] sm:$0xff]
  %v1629 = vlaneseq
  %v1630 = vshrl.u32 %v1629, 7
  %v1631 = vsub.s32 2, %v1630
  %v1632 = vrot.slane %v1623, %v1631
  %v1633 = vmul.f32 %v1632, %v1625
  %v1634 = vmul.f32 %v1632, %v1626
  %v1635 = vmul.f32 %v1632, %v1627
  %v1636 = vmul.f32 %v1632, %v1628
  %v1637 = vadd.f32 %v1617, %v1633
  %v1638 = vadd.f32 %v1618, %v1634
  %v1639 = vadd.f32 %v1619, %v1635
  %v1640 = vadd.f32 %v1620, %v1636
  %vm1641 = vcmp.gt.f32.partialorder %v1640, 1.0
  %v1642 = vsel %vm1641, 1, 0
  %v1643 = vcvt.s32.f32 %v1642
  %s1644 = scalar_lea.vmem %s5, 864
  %v1645 = vld [vmem:[%s1644] sm:$0xff]
  %v1646 = vld [vmem:[%s1644 + $0x8] sm:$0xff]
  %v1647 = vld [vmem:[%s1644 + $0x10] sm:$0xff]
  %v1648 = vld [vmem:[%s1644 + $0x18] sm:$0xff]
  %v1649 = vlaneseq
  %v1650 = vshrl.u32 %v1649, 7
  %v1651 = vsub.s32 3, %v1650
  %v1652 = vrot.slane %v1643, %v1651
  %v1653 = vmul.f32 %v1652, %v1645
  %v1654 = vmul.f32 %v1652, %v1646
  %v1655 = vmul.f32 %v1652, %v1647
  %v1656 = vmul.f32 %v1652, %v1648
  %v1657 = vadd.f32 %v1637, %v1653
  %v1658 = vadd.f32 %v1638, %v1654
  %v1659 = vadd.f32 %v1639, %v1655
  %v1660 = vadd.f32 %v1640, %v1656
  %vm1661 = vcmp.gt.f32.partialorder %v1660, 1.0
  %v1662 = vsel %vm1661, 1, 0
  %v1663 = vcvt.s32.f32 %v1662
  %s1664 = scalar_lea.vmem %s5, 896
  %v1665 = vld [vmem:[%s1664] sm:$0xff]
  %v1666 = vld [vmem:[%s1664 + $0x8] sm:$0xff]
  %v1667 = vld [vmem:[%s1664 + $0x10] sm:$0xff]
  %v1668 = vld [vmem:[%s1664 + $0x18] sm:$0xff]
  %v1669 = vlaneseq
  %v1670 = vshrl.u32 %v1669, 7
  %v1671 = vsub.s32 4, %v1670
  %v1672 = vrot.slane %v1663, %v1671
  %v1673 = vmul.f32 %v1672, %v1665
  %v1674 = vmul.f32 %v1672, %v1666
  %v1675 = vmul.f32 %v1672, %v1667
  %v1676 = vmul.f32 %v1672, %v1668
  %v1677 = vadd.f32 %v1657, %v1673
  %v1678 = vadd.f32 %v1658, %v1674
  %v1679 = vadd.f32 %v1659, %v1675
  %v1680 = vadd.f32 %v1660, %v1676
  %vm1681 = vcmp.gt.f32.partialorder %v1680, 1.0
  %v1682 = vsel %vm1681, 1, 0
  %v1683 = vcvt.s32.f32 %v1682
  %s1684 = scalar_lea.vmem %s5, 928
  %v1685 = vld [vmem:[%s1684] sm:$0xff]
  %v1686 = vld [vmem:[%s1684 + $0x8] sm:$0xff]
  %v1687 = vld [vmem:[%s1684 + $0x10] sm:$0xff]
  %v1688 = vld [vmem:[%s1684 + $0x18] sm:$0xff]
  %v1689 = vlaneseq
  %v1690 = vshrl.u32 %v1689, 7
  %v1691 = vsub.s32 5, %v1690
  %v1692 = vrot.slane %v1683, %v1691
  %v1693 = vmul.f32 %v1692, %v1685
  %v1694 = vmul.f32 %v1692, %v1686
  %v1695 = vmul.f32 %v1692, %v1687
  %v1696 = vmul.f32 %v1692, %v1688
  %v1697 = vadd.f32 %v1677, %v1693
  %v1698 = vadd.f32 %v1678, %v1694
  %v1699 = vadd.f32 %v1679, %v1695
  %v1700 = vadd.f32 %v1680, %v1696
  %vm1701 = vcmp.gt.f32.partialorder %v1697, 1.0
  %vm1702 = vcmp.gt.f32.partialorder %v1698, 1.0
  %vm1703 = vcmp.gt.f32.partialorder %v1699, 1.0
  %vm1704 = vcmp.gt.f32.partialorder %v1700, 1.0
  %v1705 = vsel %vm1701, 1, 0
  %v1706 = vsel %vm1702, 1, 0
  %v1707 = vsel %vm1703, 1, 0
  %v1708 = vsel %vm1704, 1, 0
  %v1709 = vcvt.s32.f32 %v1705
  %v1710 = vcvt.s32.f32 %v1706
  %v1711 = vcvt.s32.f32 %v1707
  %v1712 = vcvt.s32.f32 %v1708
  %v1713 = vsel %vm32, %v1709, 0.0
  %v1714 = vsel %vm33, %v1710, 0.0
  %v1715 = vsel %vm34, %v1711, 0.0
  %v1716 = vsel %vm35, %v1712, 0.0
  %vm1717 = vcmask 7168
  %1718 = vst.msk [vmem:[%s6] sm:$0xff] %vm1717, %v1713
  %1719 = vst.msk [vmem:[%s6 + $0x8] sm:$0xff] %vm1717, %v1714
  %1720 = vst.msk [vmem:[%s6 + $0x10] sm:$0xff] %vm1717, %v1715
  %1721 = vst.msk [vmem:[%s6 + $0x18] sm:$0xff] %vm1717, %v1716
  // Predicated region
  $region26: #{slayer_forward.1} parent=0 // pred_check
    _
  $region27: #{slayer_forward.1} parent=0 // pred_check_branch
    %1723 = sbr.rel (0) target = $region29
  $region28: #{slayer_forward.1} parent=0 // pred_region
    _
  $region29: #{slayer_forward.1} parent=0 // pred_fallthru
    _
  // Predicated region
  $region30: #{slayer_forward.1} parent=0 // pred_check
    _
  $region31: #{slayer_forward.1} parent=0 // pred_check_branch
    %1725 = sbr.rel (0) target = $region33
  $region32: #{slayer_forward.1} parent=0 // pred_region
    _
  $region33: #{slayer_forward.1} parent=0 // pred_fallthru
    _

</llo_original>
